<compile_context>
chip_gen: v7x
topology: tpu7x:2x2x1
jax: 0.10.0
libtpu: 0.0.40
codegen_flags: <defaults>
</compile_context>

<pallas_src>
import functools

import jax
import jax.numpy as jnp
from jax import lax
from jax.experimental import pallas as pl
from jax.experimental.pallas import tpu as pltpu


def _round_up(x, m):
    return (x + m - 1) // m * m


def _basic_block_kernel(x_ref, m_ref, w1_ref, w2_ref, s1_ref, b1_ref,
                        s2_ref, b2_ref, o_ref, slab1_ref, slab2_ref,
                        *, img_w, compute_dtype):
    """Fused BasicBlock (stride=1), whole batch in one grid-less invocation.

    Layout: channels on sublanes, (batch * H * W) on lanes.
      x_ref     : (Cp, L)     f32      input (channels zero-padded to Cp)
      m_ref     : (9, L)      compute  per-tap validity masks (0/1)
      w1_ref    : (Pp, 9*Cp)  compute  conv1 weights, im2col-matched layout
      w2_ref    : (Pp, 9*Pp)  compute  conv2 weights
      s*_ref/b*_ref : (Pp, 1) f32      folded BatchNorm scale / bias
      o_ref     : (Pp, L)     f32      output
      slab1_ref : (9*Cp, L)   compute  im2col slab for conv1 (VMEM scratch)
      slab2_ref : (9*Pp, L)   compute  im2col slab for conv2 (VMEM scratch)
    """
    Cp, L = x_ref.shape
    Pp = o_ref.shape[0]

    x = x_ref[...]                        # f32, reused for the residual add
    xc = x.astype(compute_dtype)

    # ---- conv1: im2col slab via 9 lane rotations + border masks ----
    for t in range(9):
        dy, dx = t // 3 - 1, t % 3 - 1
        s = dy * img_w + dx               # flattened spatial shift of this tap
        shifted = xc if s == 0 else pltpu.roll(xc, (-s) % L, axis=1)
        # masked positions are exactly the ones whose roll wrapped across an
        # image/row boundary, so the batch fold into the lane axis is exact.
        slab1_ref[t * Cp:(t + 1) * Cp, :] = shifted * m_ref[t:t + 1, :]

    acc1 = jnp.dot(w1_ref[...], slab1_ref[...],
                   preferred_element_type=jnp.float32)        # (Pp, L) f32
    y1 = jnp.maximum(acc1 * s1_ref[...] + b1_ref[...], 0.0)    # bn1 + relu
    y1c = y1.astype(compute_dtype)

    # ---- conv2 ----
    for t in range(9):
        dy, dx = t // 3 - 1, t % 3 - 1
        s = dy * img_w + dx
        shifted = y1c if s == 0 else pltpu.roll(y1c, (-s) % L, axis=1)
        slab2_ref[t * Pp:(t + 1) * Pp, :] = shifted * m_ref[t:t + 1, :]

    acc2 = jnp.dot(w2_ref[...], slab2_ref[...],
                   preferred_element_type=jnp.float32)        # (Pp, L) f32
    y2 = acc2 * s2_ref[...] + b2_ref[...]                      # bn2

    # identity shortcut (stride == 1 -> C == P) + final relu; x already in VMEM
    o_ref[...] = jnp.maximum(x + y2, 0.0)


def _fold_bn(gamma, beta, mean, var, eps, p_pad):
    scale = (gamma / jnp.sqrt(var + eps)).astype(jnp.float32)
    bias = (beta - mean * scale).astype(jnp.float32)
    scale = jnp.pad(scale, (0, p_pad - scale.shape[0]))
    bias = jnp.pad(bias, (0, p_pad - bias.shape[0]))
    return scale.reshape(-1, 1), bias.reshape(-1, 1)


def _im2col_weight(w_hwio, cin_pad, cout_pad, dtype):
    """(3,3,Cin,Cout) HWIO -> (Cout_pad, 9*Cin_pad), matching slab row order."""
    kh, kw, cin, cout = w_hwio.shape
    w = jnp.pad(w_hwio.astype(jnp.float32),
                ((0, 0), (0, 0), (0, cin_pad - cin), (0, cout_pad - cout)))
    return w.reshape(kh * kw * cin_pad, cout_pad).T.astype(dtype)


def _tap_masks(n, h, w, dtype):
    """(9, n*h*w) 0/1 masks marking in-bounds positions for each 3x3 tap."""
    hw = jnp.arange(h * w)
    hh, ww = hw // w, hw % w
    rows = []
    for t in range(9):
        dy, dx = t // 3 - 1, t % 3 - 1
        valid = ((hh + dy >= 0) & (hh + dy < h) &
                 (ww + dx >= 0) & (ww + dx < w))
        rows.append(valid)
    m = jnp.stack(rows).astype(dtype)          # (9, H*W)
    return jnp.tile(m, (1, n))                 # (9, N*H*W)


def basic_block_forward(x_nchw, w1_hwio, w2_hwio, bn1, bn2, *, stride=1,
                        eps=1e-5, compute_dtype=jnp.float32):
    """BasicBlock forward (inference-mode BatchNorm) as one fused Pallas kernel.

    x_nchw : (N, C, H, W) float32 — NCHW like the PyTorch module
    w1_hwio: (3, 3, C, P) conv1 weights (HWIO)
    w2_hwio: (3, 3, P, P) conv2 weights (HWIO)
    bn1/bn2: tuples (gamma, beta, running_mean, running_var), each shape (P,)
    compute_dtype: matmul-operand dtype; jnp.bfloat16 enables the v6e/v7x MXU
                   fast path (BN/ReLU/residual stay f32 regardless).
    """
    if stride != 1:
        # TODO(synk): stride>1 downsample path not implemented.
        raise NotImplementedError("Pallas BasicBlock kernel supports stride=1 only.")

    N, C, H, W = x_nchw.shape
    P = w1_hwio.shape[-1]
    assert w1_hwio.shape == (3, 3, C, P)
    assert w2_hwio.shape == (3, 3, P, P)
    assert C == P, "stride=1 BasicBlock requires in_planes == planes"

    Cp = _round_up(C, 8)          # sublane-aligned channel count
    Pp = _round_up(P, 8)
    L = N * H * W                 # lane axis (512 at the test shape)

    # channels-on-sublane / (batch*spatial)-on-lane layout: (Cp, N*H*W)
    x_cs = jnp.transpose(x_nchw.astype(jnp.float32), (1, 0, 2, 3)).reshape(C, L)
    x_cs = jnp.pad(x_cs, ((0, Cp - C), (0, 0)))

    w1 = _im2col_weight(w1_hwio, Cp, Pp, compute_dtype)
    w2 = _im2col_weight(w2_hwio, Pp, Pp, compute_dtype)
    s1, b1 = _fold_bn(*bn1, eps, Pp)
    s2, b2 = _fold_bn(*bn2, eps, Pp)
    masks = _tap_masks(N, H, W, compute_dtype)

    kernel = functools.partial(_basic_block_kernel, img_w=W,
                               compute_dtype=compute_dtype)
    vmem = pl.BlockSpec(memory_space=pltpu.MemorySpace.VMEM)

    out = pl.pallas_call(
        kernel,
        out_shape=jax.ShapeDtypeStruct((Pp, L), jnp.float32),
        in_specs=[vmem] * 8,
        out_specs=vmem,
        scratch_shapes=[
            pltpu.VMEM((9 * Cp, L), compute_dtype),   # im2col slab, conv1
            pltpu.VMEM((9 * Pp, L), compute_dtype),   # im2col slab, conv2
        ],
    )(x_cs, masks, w1, w2, s1, b1, s2, b2)

    out = out[:P].reshape(P, N, H, W)
    return jnp.transpose(out, (1, 0, 2, 3)).astype(x_nchw.dtype)


def _reference_forward(x_nchw, w1, w2, bn1, bn2, eps=1e-5):
    """Pure-JAX reference: conv3x3 -> BN -> ReLU -> conv3x3 -> BN -> add -> ReLU."""
    x = jnp.transpose(x_nchw, (0, 2, 3, 1)).astype(jnp.float32)
    dn = ("NHWC", "HWIO", "NHWC")
    hp = lax.Precision.HIGHEST

    def bn(z, params):
        g, b, m, v = params
        return (z - m) / jnp.sqrt(v + eps) * g + b

    y = lax.conv_general_dilated(x, w1, (1, 1), ((1, 1), (1, 1)),
                                 dimension_numbers=dn, precision=hp)
    y = jnp.maximum(bn(y, bn1), 0.0)
    y = lax.conv_general_dilated(y, w2, (1, 1), ((1, 1), (1, 1)),
                                 dimension_numbers=dn, precision=hp)
    y = bn(y, bn2)
    out = jnp.maximum(x + y, 0.0)
    return jnp.transpose(out, (0, 3, 1, 2))


if __name__ == "__main__":
    key = jax.random.PRNGKey(0)
    N, C, H, W = 2, 4, 16, 16
    P = 4  # planes (== in_planes because stride == 1)

    ks = jax.random.split(key, 11)
    x = jax.random.normal(ks[0], (N, C, H, W), jnp.float32)
    w1 = 0.2 * jax.random.normal(ks[1], (3, 3, C, P), jnp.float32)
    w2 = 0.2 * jax.random.normal(ks[2], (3, 3, P, P), jnp.float32)
    bn1 = (1.0 + 0.1 * jax.random.normal(ks[3], (P,), jnp.float32),
           0.1 * jax.random.normal(ks[4], (P,), jnp.float32),
           0.1 * jax.random.normal(ks[5], (P,), jnp.float32),
           0.5 + jnp.abs(jax.random.normal(ks[6], (P,), jnp.float32)))
    bn2 = (1.0 + 0.1 * jax.random.normal(ks[7], (P,), jnp.float32),
           0.1 * jax.random.normal(ks[8], (P,), jnp.float32),
           0.1 * jax.random.normal(ks[9], (P,), jnp.float32),
           0.5 + jnp.abs(jax.random.normal(ks[10], (P,), jnp.float32)))

    out = basic_block_forward(x, w1, w2, bn1, bn2, stride=1)
    out = jax.block_until_ready(out)

    ref = _reference_forward(x, w1, w2, bn1, bn2)
    assert out.shape == ref.shape and out.dtype == ref.dtype
    max_err = float(jnp.max(jnp.abs(out - ref)))
    assert jnp.allclose(out, ref, atol=2e-3, rtol=2e-3), f"max abs err = {max_err}"

    print("KERNEL_OK")
</pallas_src>

<mosaic_0001>
module attributes {stable_mosaic.version = 11 : i64} {
  func.func @_basic_block_kernel(%arg0: memref<8x512xf32, #tpu.memory_space<vmem>>, %arg1: memref<9x512xf32, #tpu.memory_space<vmem>>, %arg2: memref<8x72xf32, #tpu.memory_space<vmem>>, %arg3: memref<8x72xf32, #tpu.memory_space<vmem>>, %arg4: memref<8x1xf32, #tpu.memory_space<vmem>>, %arg5: memref<8x1xf32, #tpu.memory_space<vmem>>, %arg6: memref<8x1xf32, #tpu.memory_space<vmem>>, %arg7: memref<8x1xf32, #tpu.memory_space<vmem>>, %arg8: memref<8x512xf32, #tpu.memory_space<vmem>>, %arg9: memref<72x512xf32, #tpu.memory_space<vmem>>, %arg10: memref<72x512xf32, #tpu.memory_space<vmem>>) attributes {dimension_semantics = [], scalar_prefetch = 0 : i64, scratch_operands = 2 : i64, tpu.core_type = #tpu.core_type<tc>} {
    %c0 = arith.constant 0 : index
    %c0_0 = arith.constant 0 : index
    %0 = vector.load %arg0[%c0, %c0_0] : memref<8x512xf32, #tpu.memory_space<vmem>>, vector<8x512xf32>
    %c17_i32 = arith.constant 17 : i32
    %1 = tpu.dynamic_rotate %0 by %c17_i32 dim 1 : vector<8x512xf32>, i32 -> vector<8x512xf32>
    %c0_1 = arith.constant 0 : index
    %c0_2 = arith.constant 0 : index
    %2 = vector.load %arg1[%c0_1, %c0_2] : memref<9x512xf32, #tpu.memory_space<vmem>>, vector<1x512xf32>
    %3 = vector.broadcast %2 : vector<1x512xf32> to vector<8x512xf32>
    %4 = arith.mulf %1, %3 : vector<8x512xf32>
    %c0_3 = arith.constant 0 : index
    %c0_4 = arith.constant 0 : index
    %5 = vector.load %arg9[%c0_3, %c0_4] : memref<72x512xf32, #tpu.memory_space<vmem>>, vector<8x512xf32>
    tpu.vector_store %arg9[%c0_3, %c0_4], %4 {strides = array<i32>} : memref<72x512xf32, #tpu.memory_space<vmem>>, vector<8x512xf32>,
    %c16_i32 = arith.constant 16 : i32
    %6 = tpu.dynamic_rotate %0 by %c16_i32 dim 1 : vector<8x512xf32>, i32 -> vector<8x512xf32>
    %c1 = arith.constant 1 : index
    %c0_5 = arith.constant 0 : index
    %7 = vector.load %arg1[%c1, %c0_5] : memref<9x512xf32, #tpu.memory_space<vmem>>, vector<1x512xf32>
    %8 = vector.broadcast %7 : vector<1x512xf32> to vector<8x512xf32>
    %9 = arith.mulf %6, %8 : vector<8x512xf32>
    %c8 = arith.constant 8 : index
    %c0_6 = arith.constant 0 : index
    %10 = vector.load %arg9[%c8, %c0_6] : memref<72x512xf32, #tpu.memory_space<vmem>>, vector<8x512xf32>
    tpu.vector_store %arg9[%c8, %c0_6], %9 {strides = array<i32>} : memref<72x512xf32, #tpu.memory_space<vmem>>, vector<8x512xf32>,
    %c15_i32 = arith.constant 15 : i32
    %11 = tpu.dynamic_rotate %0 by %c15_i32 dim 1 : vector<8x512xf32>, i32 -> vector<8x512xf32>
    %c2 = arith.constant 2 : index
    %c0_7 = arith.constant 0 : index
    %12 = vector.load %arg1[%c2, %c0_7] : memref<9x512xf32, #tpu.memory_space<vmem>>, vector<1x512xf32>
    %13 = vector.broadcast %12 : vector<1x512xf32> to vector<8x512xf32>
    %14 = arith.mulf %11, %13 : vector<8x512xf32>
    %c16 = arith.constant 16 : index
    %c0_8 = arith.constant 0 : index
    %15 = vector.load %arg9[%c16, %c0_8] : memref<72x512xf32, #tpu.memory_space<vmem>>, vector<8x512xf32>
    tpu.vector_store %arg9[%c16, %c0_8], %14 {strides = array<i32>} : memref<72x512xf32, #tpu.memory_space<vmem>>, vector<8x512xf32>,
    %c1_i32 = arith.constant 1 : i32
    %16 = tpu.dynamic_rotate %0 by %c1_i32 dim 1 : vector<8x512xf32>, i32 -> vector<8x512xf32>
    %c3 = arith.constant 3 : index
    %c0_9 = arith.constant 0 : index
    %17 = vector.load %arg1[%c3, %c0_9] : memref<9x512xf32, #tpu.memory_space<vmem>>, vector<1x512xf32>
    %18 = vector.broadcast %17 : vector<1x512xf32> to vector<8x512xf32>
    %19 = arith.mulf %16, %18 : vector<8x512xf32>
    %c24 = arith.constant 24 : index
    %c0_10 = arith.constant 0 : index
    %20 = vector.load %arg9[%c24, %c0_10] : memref<72x512xf32, #tpu.memory_space<vmem>>, vector<8x512xf32>
    tpu.vector_store %arg9[%c24, %c0_10], %19 {strides = array<i32>} : memref<72x512xf32, #tpu.memory_space<vmem>>, vector<8x512xf32>,
    %c4 = arith.constant 4 : index
    %c0_11 = arith.constant 0 : index
    %21 = vector.load %arg1[%c4, %c0_11] : memref<9x512xf32, #tpu.memory_space<vmem>>, vector<1x512xf32>
    %22 = vector.broadcast %21 : vector<1x512xf32> to vector<8x512xf32>
    %23 = arith.mulf %0, %22 : vector<8x512xf32>
    %c32 = arith.constant 32 : index
    %c0_12 = arith.constant 0 : index
    %24 = vector.load %arg9[%c32, %c0_12] : memref<72x512xf32, #tpu.memory_space<vmem>>, vector<8x512xf32>
    tpu.vector_store %arg9[%c32, %c0_12], %23 {strides = array<i32>} : memref<72x512xf32, #tpu.memory_space<vmem>>, vector<8x512xf32>,
    %c511_i32 = arith.constant 511 : i32
    %25 = tpu.dynamic_rotate %0 by %c511_i32 dim 1 : vector<8x512xf32>, i32 -> vector<8x512xf32>
    %c5 = arith.constant 5 : index
    %c0_13 = arith.constant 0 : index
    %26 = vector.load %arg1[%c5, %c0_13] : memref<9x512xf32, #tpu.memory_space<vmem>>, vector<1x512xf32>
    %27 = vector.broadcast %26 : vector<1x512xf32> to vector<8x512xf32>
    %28 = arith.mulf %25, %27 : vector<8x512xf32>
    %c40 = arith.constant 40 : index
    %c0_14 = arith.constant 0 : index
    %29 = vector.load %arg9[%c40, %c0_14] : memref<72x512xf32, #tpu.memory_space<vmem>>, vector<8x512xf32>
    tpu.vector_store %arg9[%c40, %c0_14], %28 {strides = array<i32>} : memref<72x512xf32, #tpu.memory_space<vmem>>, vector<8x512xf32>,
    %c497_i32 = arith.constant 497 : i32
    %30 = tpu.dynamic_rotate %0 by %c497_i32 dim 1 : vector<8x512xf32>, i32 -> vector<8x512xf32>
    %c6 = arith.constant 6 : index
    %c0_15 = arith.constant 0 : index
    %31 = vector.load %arg1[%c6, %c0_15] : memref<9x512xf32, #tpu.memory_space<vmem>>, vector<1x512xf32>
    %32 = vector.broadcast %31 : vector<1x512xf32> to vector<8x512xf32>
    %33 = arith.mulf %30, %32 : vector<8x512xf32>
    %c48 = arith.constant 48 : index
    %c0_16 = arith.constant 0 : index
    %34 = vector.load %arg9[%c48, %c0_16] : memref<72x512xf32, #tpu.memory_space<vmem>>, vector<8x512xf32>
    tpu.vector_store %arg9[%c48, %c0_16], %33 {strides = array<i32>} : memref<72x512xf32, #tpu.memory_space<vmem>>, vector<8x512xf32>,
    %c496_i32 = arith.constant 496 : i32
    %35 = tpu.dynamic_rotate %0 by %c496_i32 dim 1 : vector<8x512xf32>, i32 -> vector<8x512xf32>
    %c7 = arith.constant 7 : index
    %c0_17 = arith.constant 0 : index
    %36 = vector.load %arg1[%c7, %c0_17] : memref<9x512xf32, #tpu.memory_space<vmem>>, vector<1x512xf32>
    %37 = vector.broadcast %36 : vector<1x512xf32> to vector<8x512xf32>
    %38 = arith.mulf %35, %37 : vector<8x512xf32>
    %c56 = arith.constant 56 : index
    %c0_18 = arith.constant 0 : index
    %39 = vector.load %arg9[%c56, %c0_18] : memref<72x512xf32, #tpu.memory_space<vmem>>, vector<8x512xf32>
    tpu.vector_store %arg9[%c56, %c0_18], %38 {strides = array<i32>} : memref<72x512xf32, #tpu.memory_space<vmem>>, vector<8x512xf32>,
    %c495_i32 = arith.constant 495 : i32
    %40 = tpu.dynamic_rotate %0 by %c495_i32 dim 1 : vector<8x512xf32>, i32 -> vector<8x512xf32>
    %c8_19 = arith.constant 8 : index
    %c0_20 = arith.constant 0 : index
    %41 = vector.load %arg1[%c8_19, %c0_20] : memref<9x512xf32, #tpu.memory_space<vmem>>, vector<1x512xf32>
    %42 = vector.broadcast %41 : vector<1x512xf32> to vector<8x512xf32>
    %43 = arith.mulf %40, %42 : vector<8x512xf32>
    %c64 = arith.constant 64 : index
    %c0_21 = arith.constant 0 : index
    %44 = vector.load %arg9[%c64, %c0_21] : memref<72x512xf32, #tpu.memory_space<vmem>>, vector<8x512xf32>
    tpu.vector_store %arg9[%c64, %c0_21], %43 {strides = array<i32>} : memref<72x512xf32, #tpu.memory_space<vmem>>, vector<8x512xf32>,
    %c0_22 = arith.constant 0 : index
    %c0_23 = arith.constant 0 : index
    %45 = vector.load %arg2[%c0_22, %c0_23] : memref<8x72xf32, #tpu.memory_space<vmem>>, vector<8x72xf32>
    %c0_24 = arith.constant 0 : index
    %c0_25 = arith.constant 0 : index
    %46 = vector.load %arg9[%c0_24, %c0_25] : memref<72x512xf32, #tpu.memory_space<vmem>>, vector<72x512xf32>
    %cst = arith.constant dense<0.000000e+00> : vector<8x512xf32>
    %47 = tpu.matmul %45, %46, %cst {dimension_numbers = #tpu.dot_dimension_numbers<[1], [0], [0], [1], [0, 0, 1, 1], [], []>} : vector<8x72xf32>, vector<72x512xf32>, vector<8x512xf32> -> vector<8x512xf32>
    %c0_26 = arith.constant 0 : index
    %c0_27 = arith.constant 0 : index
    %48 = vector.load %arg4[%c0_26, %c0_27] : memref<8x1xf32, #tpu.memory_space<vmem>>, vector<8x1xf32>
    %49 = vector.broadcast %48 : vector<8x1xf32> to vector<8x512xf32>
    %50 = arith.mulf %47, %49 : vector<8x512xf32>
    %c0_28 = arith.constant 0 : index
    %c0_29 = arith.constant 0 : index
    %51 = vector.load %arg5[%c0_28, %c0_29] : memref<8x1xf32, #tpu.memory_space<vmem>>, vector<8x1xf32>
    %52 = vector.broadcast %51 : vector<8x1xf32> to vector<8x512xf32>
    %53 = arith.addf %50, %52 : vector<8x512xf32>
    %cst_30 = arith.constant 0.000000e+00 : f32
    %54 = vector.broadcast %cst_30 : f32 to vector<8x512xf32>
    %55 = arith.maximumf %53, %54 : vector<8x512xf32>
    %c17_i32_31 = arith.constant 17 : i32
    %56 = tpu.dynamic_rotate %55 by %c17_i32_31 dim 1 : vector<8x512xf32>, i32 -> vector<8x512xf32>
    %c0_32 = arith.constant 0 : index
    %c0_33 = arith.constant 0 : index
    %57 = vector.load %arg1[%c0_32, %c0_33] : memref<9x512xf32, #tpu.memory_space<vmem>>, vector<1x512xf32>
    %58 = vector.broadcast %57 : vector<1x512xf32> to vector<8x512xf32>
    %59 = arith.mulf %56, %58 : vector<8x512xf32>
    %c0_34 = arith.constant 0 : index
    %c0_35 = arith.constant 0 : index
    %60 = vector.load %arg10[%c0_34, %c0_35] : memref<72x512xf32, #tpu.memory_space<vmem>>, vector<8x512xf32>
    tpu.vector_store %arg10[%c0_34, %c0_35], %59 {strides = array<i32>} : memref<72x512xf32, #tpu.memory_space<vmem>>, vector<8x512xf32>,
    %c16_i32_36 = arith.constant 16 : i32
    %61 = tpu.dynamic_rotate %55 by %c16_i32_36 dim 1 : vector<8x512xf32>, i32 -> vector<8x512xf32>
    %c1_37 = arith.constant 1 : index
    %c0_38 = arith.constant 0 : index
    %62 = vector.load %arg1[%c1_37, %c0_38] : memref<9x512xf32, #tpu.memory_space<vmem>>, vector<1x512xf32>
    %63 = vector.broadcast %62 : vector<1x512xf32> to vector<8x512xf32>
    %64 = arith.mulf %61, %63 : vector<8x512xf32>
    %c8_39 = arith.constant 8 : index
    %c0_40 = arith.constant 0 : index
    %65 = vector.load %arg10[%c8_39, %c0_40] : memref<72x512xf32, #tpu.memory_space<vmem>>, vector<8x512xf32>
    tpu.vector_store %arg10[%c8_39, %c0_40], %64 {strides = array<i32>} : memref<72x512xf32, #tpu.memory_space<vmem>>, vector<8x512xf32>,
    %c15_i32_41 = arith.constant 15 : i32
    %66 = tpu.dynamic_rotate %55 by %c15_i32_41 dim 1 : vector<8x512xf32>, i32 -> vector<8x512xf32>
    %c2_42 = arith.constant 2 : index
    %c0_43 = arith.constant 0 : index
    %67 = vector.load %arg1[%c2_42, %c0_43] : memref<9x512xf32, #tpu.memory_space<vmem>>, vector<1x512xf32>
    %68 = vector.broadcast %67 : vector<1x512xf32> to vector<8x512xf32>
    %69 = arith.mulf %66, %68 : vector<8x512xf32>
    %c16_44 = arith.constant 16 : index
    %c0_45 = arith.constant 0 : index
    %70 = vector.load %arg10[%c16_44, %c0_45] : memref<72x512xf32, #tpu.memory_space<vmem>>, vector<8x512xf32>
    tpu.vector_store %arg10[%c16_44, %c0_45], %69 {strides = array<i32>} : memref<72x512xf32, #tpu.memory_space<vmem>>, vector<8x512xf32>,
    %c1_i32_46 = arith.constant 1 : i32
    %71 = tpu.dynamic_rotate %55 by %c1_i32_46 dim 1 : vector<8x512xf32>, i32 -> vector<8x512xf32>
    %c3_47 = arith.constant 3 : index
    %c0_48 = arith.constant 0 : index
    %72 = vector.load %arg1[%c3_47, %c0_48] : memref<9x512xf32, #tpu.memory_space<vmem>>, vector<1x512xf32>
    %73 = vector.broadcast %72 : vector<1x512xf32> to vector<8x512xf32>
    %74 = arith.mulf %71, %73 : vector<8x512xf32>
    %c24_49 = arith.constant 24 : index
    %c0_50 = arith.constant 0 : index
    %75 = vector.load %arg10[%c24_49, %c0_50] : memref<72x512xf32, #tpu.memory_space<vmem>>, vector<8x512xf32>
    tpu.vector_store %arg10[%c24_49, %c0_50], %74 {strides = array<i32>} : memref<72x512xf32, #tpu.memory_space<vmem>>, vector<8x512xf32>,
    %c4_51 = arith.constant 4 : index
    %c0_52 = arith.constant 0 : index
    %76 = vector.load %arg1[%c4_51, %c0_52] : memref<9x512xf32, #tpu.memory_space<vmem>>, vector<1x512xf32>
    %77 = vector.broadcast %76 : vector<1x512xf32> to vector<8x512xf32>
    %78 = arith.mulf %55, %77 : vector<8x512xf32>
    %c32_53 = arith.constant 32 : index
    %c0_54 = arith.constant 0 : index
    %79 = vector.load %arg10[%c32_53, %c0_54] : memref<72x512xf32, #tpu.memory_space<vmem>>, vector<8x512xf32>
    tpu.vector_store %arg10[%c32_53, %c0_54], %78 {strides = array<i32>} : memref<72x512xf32, #tpu.memory_space<vmem>>, vector<8x512xf32>,
    %c511_i32_55 = arith.constant 511 : i32
    %80 = tpu.dynamic_rotate %55 by %c511_i32_55 dim 1 : vector<8x512xf32>, i32 -> vector<8x512xf32>
    %c5_56 = arith.constant 5 : index
    %c0_57 = arith.constant 0 : index
    %81 = vector.load %arg1[%c5_56, %c0_57] : memref<9x512xf32, #tpu.memory_space<vmem>>, vector<1x512xf32>
    %82 = vector.broadcast %81 : vector<1x512xf32> to vector<8x512xf32>
    %83 = arith.mulf %80, %82 : vector<8x512xf32>
    %c40_58 = arith.constant 40 : index
    %c0_59 = arith.constant 0 : index
    %84 = vector.load %arg10[%c40_58, %c0_59] : memref<72x512xf32, #tpu.memory_space<vmem>>, vector<8x512xf32>
    tpu.vector_store %arg10[%c40_58, %c0_59], %83 {strides = array<i32>} : memref<72x512xf32, #tpu.memory_space<vmem>>, vector<8x512xf32>,
    %c497_i32_60 = arith.constant 497 : i32
    %85 = tpu.dynamic_rotate %55 by %c497_i32_60 dim 1 : vector<8x512xf32>, i32 -> vector<8x512xf32>
    %c6_61 = arith.constant 6 : index
    %c0_62 = arith.constant 0 : index
    %86 = vector.load %arg1[%c6_61, %c0_62] : memref<9x512xf32, #tpu.memory_space<vmem>>, vector<1x512xf32>
    %87 = vector.broadcast %86 : vector<1x512xf32> to vector<8x512xf32>
    %88 = arith.mulf %85, %87 : vector<8x512xf32>
    %c48_63 = arith.constant 48 : index
    %c0_64 = arith.constant 0 : index
    %89 = vector.load %arg10[%c48_63, %c0_64] : memref<72x512xf32, #tpu.memory_space<vmem>>, vector<8x512xf32>
    tpu.vector_store %arg10[%c48_63, %c0_64], %88 {strides = array<i32>} : memref<72x512xf32, #tpu.memory_space<vmem>>, vector<8x512xf32>,
    %c496_i32_65 = arith.constant 496 : i32
    %90 = tpu.dynamic_rotate %55 by %c496_i32_65 dim 1 : vector<8x512xf32>, i32 -> vector<8x512xf32>
    %c7_66 = arith.constant 7 : index
    %c0_67 = arith.constant 0 : index
    %91 = vector.load %arg1[%c7_66, %c0_67] : memref<9x512xf32, #tpu.memory_space<vmem>>, vector<1x512xf32>
    %92 = vector.broadcast %91 : vector<1x512xf32> to vector<8x512xf32>
    %93 = arith.mulf %90, %92 : vector<8x512xf32>
    %c56_68 = arith.constant 56 : index
    %c0_69 = arith.constant 0 : index
    %94 = vector.load %arg10[%c56_68, %c0_69] : memref<72x512xf32, #tpu.memory_space<vmem>>, vector<8x512xf32>
    tpu.vector_store %arg10[%c56_68, %c0_69], %93 {strides = array<i32>} : memref<72x512xf32, #tpu.memory_space<vmem>>, vector<8x512xf32>,
    %c495_i32_70 = arith.constant 495 : i32
    %95 = tpu.dynamic_rotate %55 by %c495_i32_70 dim 1 : vector<8x512xf32>, i32 -> vector<8x512xf32>
    %c8_71 = arith.constant 8 : index
    %c0_72 = arith.constant 0 : index
    %96 = vector.load %arg1[%c8_71, %c0_72] : memref<9x512xf32, #tpu.memory_space<vmem>>, vector<1x512xf32>
    %97 = vector.broadcast %96 : vector<1x512xf32> to vector<8x512xf32>
    %98 = arith.mulf %95, %97 : vector<8x512xf32>
    %c64_73 = arith.constant 64 : index
    %c0_74 = arith.constant 0 : index
    %99 = vector.load %arg10[%c64_73, %c0_74] : memref<72x512xf32, #tpu.memory_space<vmem>>, vector<8x512xf32>
    tpu.vector_store %arg10[%c64_73, %c0_74], %98 {strides = array<i32>} : memref<72x512xf32, #tpu.memory_space<vmem>>, vector<8x512xf32>,
    %c0_75 = arith.constant 0 : index
    %c0_76 = arith.constant 0 : index
    %100 = vector.load %arg3[%c0_75, %c0_76] : memref<8x72xf32, #tpu.memory_space<vmem>>, vector<8x72xf32>
    %c0_77 = arith.constant 0 : index
    %c0_78 = arith.constant 0 : index
    %101 = vector.load %arg10[%c0_77, %c0_78] : memref<72x512xf32, #tpu.memory_space<vmem>>, vector<72x512xf32>
    %cst_79 = arith.constant dense<0.000000e+00> : vector<8x512xf32>
    %102 = tpu.matmul %100, %101, %cst_79 {dimension_numbers = #tpu.dot_dimension_numbers<[1], [0], [0], [1], [0, 0, 1, 1], [], []>} : vector<8x72xf32>, vector<72x512xf32>, vector<8x512xf32> -> vector<8x512xf32>
    %c0_80 = arith.constant 0 : index
    %c0_81 = arith.constant 0 : index
    %103 = vector.load %arg6[%c0_80, %c0_81] : memref<8x1xf32, #tpu.memory_space<vmem>>, vector<8x1xf32>
    %104 = vector.broadcast %103 : vector<8x1xf32> to vector<8x512xf32>
    %105 = arith.mulf %102, %104 : vector<8x512xf32>
    %c0_82 = arith.constant 0 : index
    %c0_83 = arith.constant 0 : index
    %106 = vector.load %arg7[%c0_82, %c0_83] : memref<8x1xf32, #tpu.memory_space<vmem>>, vector<8x1xf32>
    %107 = vector.broadcast %106 : vector<8x1xf32> to vector<8x512xf32>
    %108 = arith.addf %105, %107 : vector<8x512xf32>
    %109 = arith.addf %0, %108 : vector<8x512xf32>
    %cst_84 = arith.constant 0.000000e+00 : f32
    %110 = vector.broadcast %cst_84 : f32 to vector<8x512xf32>
    %111 = arith.maximumf %109, %110 : vector<8x512xf32>
    %c0_85 = arith.constant 0 : index
    %c0_86 = arith.constant 0 : index
    %112 = vector.load %arg8[%c0_85, %c0_86] : memref<8x512xf32, #tpu.memory_space<vmem>>, vector<8x512xf32>
    tpu.vector_store %arg8[%c0_85, %c0_86], %111 {strides = array<i32>} : memref<8x512xf32, #tpu.memory_space<vmem>>, vector<8x512xf32>,
    return
  }
}

</mosaic_0001>

<llo_original>
// kernel: tpu_custom_call.1
$region0: #{tpu_custom_call.1}
  #allocation0 [shape = 'u32[]', space=smem, size = 0x4, offset = 0x4, fixed_abs, tag = 'smem constant byte address 0x4 - core index']
  #allocation1 [shape = 'u32[144,128]{1,0:T(1,128)}', space=vmem, size = 0x12000, scoped, tag = 'internal scratch']
  #allocation2 [shape = 'f32[72,512]{1,0:T(8,128)}', space=vmem, size = 0x24000, scoped, tag = 'scratch operand']
  #allocation3 [shape = 'f32[72,512]{1,0:T(8,128)}', space=vmem, size = 0x24000, scoped, tag = 'scratch operand']
  %s0 = inlined_call_operand.vmem [shape: f32[8,512], index: 0, kind: input, shape index: {}]
  %s1 = inlined_call_operand.hbm [shape: f32[9,512], index: 1, kind: input, shape index: {}]
  %s2 = inlined_call_operand.vmem [shape: f32[8,72], index: 2, kind: input, shape index: {}]
  %s3 = inlined_call_operand.hbm [shape: f32[8,72], index: 3, kind: input, shape index: {}]
  %s4 = inlined_call_operand.vmem [shape: f32[8,1], index: 4, kind: input, shape index: {}]
  %s5 = inlined_call_operand.vmem [shape: f32[8,1], index: 5, kind: input, shape index: {}]
  %s6 = inlined_call_operand.vmem [shape: f32[8,1], index: 6, kind: input, shape index: {}]
  %s7 = inlined_call_operand.vmem [shape: f32[8,1], index: 7, kind: input, shape index: {}]
  %s8 = inlined_call_operand.hbm [shape: f32[8,512], index: 8, kind: output, shape index: {}]
  %s9 = sld [smem:[#allocation0]]
  $region50: #{tpu_custom_call.1} parent=0
    _
  %s11 = ssub.s32 1, %s9
  %s12 = scalar_select 0, %s11, %s9
  $region1: #{tpu_custom_call.1} parent=0
    #allocation4 [shape = 'u8[32768]{0}', space=vmem, size = 0x8000, scoped, tag = 'input window, operand 1, single buffered']
    #allocation5 [shape = 's32[1]{0}', space=sflag, size = 0x4, scoped, tag = 'scoped memory for tpu_custom_call.1']
    #allocation6 [shape = 's32[1]{0}', space=sflag, size = 0x4, scoped, tag = 'scoped memory for tpu_custom_call.1']
    #allocation7 [shape = 'u8[4096]{0}', space=vmem, size = 0x1000, scoped, tag = 'input window, operand 3, single buffered']
    #allocation8 [shape = 's32[1]{0}', space=sflag, size = 0x4, scoped, tag = 'scoped memory for tpu_custom_call.1']
    #allocation9 [shape = 'u8[16384]{0}', space=vmem, size = 0x4000, scoped, tag = 'output window, operand 0, single buffered']
    %13 = vsyncpa [#allocation5], 0
    %14 = vsyncpa [#allocation8], 0
    %15 = vsyncpa [#allocation6], 0
    // Predicated region
    $region2: #{tpu_custom_call.1} parent=1 // pred_check
      _
    $region3: #{tpu_custom_call.1} parent=1 // pred_check_branch
      %17 = sbr.rel (0) target = $region5
    $region4: #{tpu_custom_call.1} parent=1 // pred_region
      _
    $region5: #{tpu_custom_call.1} parent=1 // pred_fallthru
      _
    // Predicated region
    $region6: #{tpu_custom_call.1} parent=1 // pred_check
      _
    $region7: #{tpu_custom_call.1} parent=1 // pred_check_branch
      %19 = sbr.rel (0) target = $region9
    $region8: #{tpu_custom_call.1} parent=1 // pred_region
      %s21 = ssub.s32 1024, 1024
      %22 = vsyncadd [#allocation5], %s21
      %s23 = sshll.u32 [#allocation4], 4
      %s24 = int_to_ptr.vmem [resolvable:$true] %s23
      %29 = dma.hbm_to_vmem [thread:$0]  %s1, 1024, %s24, [#allocation5], 512, 512, 32
    $region9: #{tpu_custom_call.1} parent=1 // pred_fallthru
      _
    // Predicated region
    $region10: #{tpu_custom_call.1} parent=1 // pred_check
      _
    $region11: #{tpu_custom_call.1} parent=1 // pred_check_branch
      %31 = sbr.rel (0) target = $region13
    $region12: #{tpu_custom_call.1} parent=1 // pred_region
      _
    $region13: #{tpu_custom_call.1} parent=1 // pred_fallthru
      _
    // Predicated region
    $region14: #{tpu_custom_call.1} parent=1 // pred_check
      _
    $region15: #{tpu_custom_call.1} parent=1 // pred_check_branch
      %33 = sbr.rel (0) target = $region17
    $region16: #{tpu_custom_call.1} parent=1 // pred_region
      %s35 = ssub.s32 128, 128
      %36 = vsyncadd [#allocation8], %s35
      %s38 = sshll.u32 [#allocation7], 4
      %s39 = int_to_ptr.vmem [resolvable:$true] %s38
      %41 = dma.hbm_to_vmem [thread:$0]  %s3, 128, %s39, [#allocation8]
    $region17: #{tpu_custom_call.1} parent=1 // pred_fallthru
      _
    // Predicated region
    $region18: #{tpu_custom_call.1} parent=1 // pred_check
      _
    $region19: #{tpu_custom_call.1} parent=1 // pred_check_branch
      %43 = sbr.rel (0) target = $region21
    $region20: #{tpu_custom_call.1} parent=1 // pred_region
      _
    $region21: #{tpu_custom_call.1} parent=1 // pred_fallthru
      _
    // Predicated region
    $region22: #{tpu_custom_call.1} parent=1 // pred_check
      _
    $region23: #{tpu_custom_call.1} parent=1 // pred_check_branch
      %45 = sbr.rel (0) target = $region25
    $region24: #{tpu_custom_call.1} parent=1 // pred_region
      _
    $region25: #{tpu_custom_call.1} parent=1 // pred_fallthru
      _
    // Predicated region
    $region26: #{tpu_custom_call.1} parent=1 // pred_check
      _
    $region27: #{tpu_custom_call.1} parent=1 // pred_check_branch
      %47 = sbr.rel (0) target = $region29
    $region28: #{tpu_custom_call.1} parent=1 // pred_region
      _
    $region29: #{tpu_custom_call.1} parent=1 // pred_fallthru
      _
    // Predicated region
    $region30: #{tpu_custom_call.1} parent=1 // pred_check
      _
    $region31: #{tpu_custom_call.1} parent=1 // pred_check_branch
      %49 = sbr.rel (0) target = $region33
    $region32: #{tpu_custom_call.1} parent=1 // pred_region
      _
    $region33: #{tpu_custom_call.1} parent=1 // pred_fallthru
      _
    // Predicated region
    $region34: #{tpu_custom_call.1} parent=1 // pred_check
      _
    $region35: #{tpu_custom_call.1} parent=1 // pred_check_branch
      %51 = sbr.rel (0) target = $region37
    $region36: #{tpu_custom_call.1} parent=1 // pred_region
      %52 = dma.done [#allocation5], 1024
    $region37: #{tpu_custom_call.1} parent=1 // pred_fallthru
      _
    // Predicated region
    $region38: #{tpu_custom_call.1} parent=1 // pred_check
      _
    $region39: #{tpu_custom_call.1} parent=1 // pred_check_branch
      %54 = sbr.rel (0) target = $region41
    $region40: #{tpu_custom_call.1} parent=1 // pred_region
      %55 = dma.done [#allocation8], 128
    $region41: #{tpu_custom_call.1} parent=1 // pred_fallthru
      _
    %v56 = vld [vmem:[%s0] sm:$0xff]
    %v57 = vld [vmem:[%s0 + $0x8] sm:$0xff]
    %v58 = vld [vmem:[%s0 + $0x10] sm:$0xff]
    %v59 = vld [vmem:[%s0 + $0x18] sm:$0xff]
    %60 = vrot.lane.b32.xlu0 %v56, 17
    %v61 = vpop.permute.xlu0 %60
    %62 = vrot.lane.b32.xlu0 %v57, 17
    %v63 = vpop.permute.xlu0 %62
    %64 = vrot.lane.b32.xlu0 %v58, 17
    %v65 = vpop.permute.xlu0 %64
    %66 = vrot.lane.b32.xlu0 %v59, 17
    %v67 = vpop.permute.xlu0 %66
    %v68 = vlaneseq
    %v69 = vand.u32 %v68, 127
    %vm70 = vcmp.lt.s32.totalorder %v69, 17
    %v71 = vsel %vm70, %v65, %v67
    %v72 = vsel %vm70, %v63, %v65
    %v73 = vsel %vm70, %v61, %v63
    %v74 = vsel %vm70, %v67, %v61
    %v75 = vld [vmem:[#allocation4] ss:$8 sm:$0xf]
    %v77 = vlaneseq
    %v78 = vshrl.u32 %v77, 7
    %v79 = vsub.s32 0, %v78
    %v80 = vrot.slane %v75, %v79
    %v81 = vlaneseq
    %v82 = vshrl.u32 %v81, 7
    %v83 = vsub.s32 1, %v82
    %v84 = vrot.slane %v75, %v83
    %v85 = vlaneseq
    %v86 = vshrl.u32 %v85, 7
    %v87 = vsub.s32 2, %v86
    %v88 = vrot.slane %v75, %v87
    %v89 = vlaneseq
    %v90 = vshrl.u32 %v89, 7
    %v91 = vsub.s32 3, %v90
    %v92 = vrot.slane %v75, %v91
    %v97 = vmul.f32 %v74, %v80
    %v98 = vmul.f32 %v73, %v84
    %v99 = vmul.f32 %v72, %v88
    %v100 = vmul.f32 %v71, %v92
    %101 = vst [vmem:[#allocation2] sm:$0xff] %v97
    %102 = vst [vmem:[#allocation2 + $0x8] sm:$0xff] %v98
    %103 = vst [vmem:[#allocation2 + $0x10] sm:$0xff] %v99
    %104 = vst [vmem:[#allocation2 + $0x18] sm:$0xff] %v100
    %105 = vrot.lane.b32.xlu0 %v56, 16
    %v106 = vpop.permute.xlu0 %105
    %107 = vrot.lane.b32.xlu0 %v57, 16
    %v108 = vpop.permute.xlu0 %107
    %109 = vrot.lane.b32.xlu0 %v58, 16
    %v110 = vpop.permute.xlu0 %109
    %111 = vrot.lane.b32.xlu0 %v59, 16
    %v112 = vpop.permute.xlu0 %111
    %vm113 = vcmp.lt.s32.totalorder %v69, 16
    %v114 = vsel %vm113, %v110, %v112
    %v115 = vsel %vm113, %v108, %v110
    %v116 = vsel %vm113, %v106, %v108
    %v117 = vsel %vm113, %v112, %v106
    %s118 = scalar_lea.vmem [#allocation4], 1
    %v119 = vld [vmem:[%s118] ss:$8 sm:$0xf]
    %v121 = vlaneseq
    %v122 = vshrl.u32 %v121, 7
    %v123 = vsub.s32 0, %v122
    %v124 = vrot.slane %v119, %v123
    %v125 = vlaneseq
    %v126 = vshrl.u32 %v125, 7
    %v127 = vsub.s32 1, %v126
    %v128 = vrot.slane %v119, %v127
    %v129 = vlaneseq
    %v130 = vshrl.u32 %v129, 7
    %v131 = vsub.s32 2, %v130
    %v132 = vrot.slane %v119, %v131
    %v133 = vlaneseq
    %v134 = vshrl.u32 %v133, 7
    %v135 = vsub.s32 3, %v134
    %v136 = vrot.slane %v119, %v135
    %v141 = vmul.f32 %v117, %v124
    %v142 = vmul.f32 %v116, %v128
    %v143 = vmul.f32 %v115, %v132
    %v144 = vmul.f32 %v114, %v136
    %145 = vst [vmem:[#allocation2 + $0x20] sm:$0xff] %v141
    %146 = vst [vmem:[#allocation2 + $0x28] sm:$0xff] %v142
    %147 = vst [vmem:[#allocation2 + $0x30] sm:$0xff] %v143
    %148 = vst [vmem:[#allocation2 + $0x38] sm:$0xff] %v144
    %149 = vrot.lane.b32.xlu0 %v56, 15
    %v150 = vpop.permute.xlu0 %149
    %151 = vrot.lane.b32.xlu0 %v57, 15
    %v152 = vpop.permute.xlu0 %151
    %153 = vrot.lane.b32.xlu0 %v58, 15
    %v154 = vpop.permute.xlu0 %153
    %155 = vrot.lane.b32.xlu0 %v59, 15
    %v156 = vpop.permute.xlu0 %155
    %vm157 = vcmp.lt.s32.totalorder %v69, 15
    %v158 = vsel %vm157, %v154, %v156
    %v159 = vsel %vm157, %v152, %v154
    %v160 = vsel %vm157, %v150, %v152
    %v161 = vsel %vm157, %v156, %v150
    %s162 = scalar_lea.vmem [#allocation4], 2
    %v163 = vld [vmem:[%s162] ss:$8 sm:$0xf]
    %v165 = vlaneseq
    %v166 = vshrl.u32 %v165, 7
    %v167 = vsub.s32 0, %v166
    %v168 = vrot.slane %v163, %v167
    %v169 = vlaneseq
    %v170 = vshrl.u32 %v169, 7
    %v171 = vsub.s32 1, %v170
    %v172 = vrot.slane %v163, %v171
    %v173 = vlaneseq
    %v174 = vshrl.u32 %v173, 7
    %v175 = vsub.s32 2, %v174
    %v176 = vrot.slane %v163, %v175
    %v177 = vlaneseq
    %v178 = vshrl.u32 %v177, 7
    %v179 = vsub.s32 3, %v178
    %v180 = vrot.slane %v163, %v179
    %v185 = vmul.f32 %v161, %v168
    %v186 = vmul.f32 %v160, %v172
    %v187 = vmul.f32 %v159, %v176
    %v188 = vmul.f32 %v158, %v180
    %189 = vst [vmem:[#allocation2 + $0x40] sm:$0xff] %v185
    %190 = vst [vmem:[#allocation2 + $0x48] sm:$0xff] %v186
    %191 = vst [vmem:[#allocation2 + $0x50] sm:$0xff] %v187
    %192 = vst [vmem:[#allocation2 + $0x58] sm:$0xff] %v188
    %193 = vrot.lane.b32.xlu0 %v56, 1
    %v194 = vpop.permute.xlu0 %193
    %195 = vrot.lane.b32.xlu0 %v57, 1
    %v196 = vpop.permute.xlu0 %195
    %197 = vrot.lane.b32.xlu0 %v58, 1
    %v198 = vpop.permute.xlu0 %197
    %199 = vrot.lane.b32.xlu0 %v59, 1
    %v200 = vpop.permute.xlu0 %199
    %vm201 = vcmp.lt.s32.totalorder %v69, 1
    %v202 = vsel %vm201, %v198, %v200
    %v203 = vsel %vm201, %v196, %v198
    %v204 = vsel %vm201, %v194, %v196
    %v205 = vsel %vm201, %v200, %v194
    %s206 = scalar_lea.vmem [#allocation4], 3
    %v207 = vld [vmem:[%s206] ss:$8 sm:$0xf]
    %v209 = vlaneseq
    %v210 = vshrl.u32 %v209, 7
    %v211 = vsub.s32 0, %v210
    %v212 = vrot.slane %v207, %v211
    %v213 = vlaneseq
    %v214 = vshrl.u32 %v213, 7
    %v215 = vsub.s32 1, %v214
    %v216 = vrot.slane %v207, %v215
    %v217 = vlaneseq
    %v218 = vshrl.u32 %v217, 7
    %v219 = vsub.s32 2, %v218
    %v220 = vrot.slane %v207, %v219
    %v221 = vlaneseq
    %v222 = vshrl.u32 %v221, 7
    %v223 = vsub.s32 3, %v222
    %v224 = vrot.slane %v207, %v223
    %v229 = vmul.f32 %v205, %v212
    %v230 = vmul.f32 %v204, %v216
    %v231 = vmul.f32 %v203, %v220
    %v232 = vmul.f32 %v202, %v224
    %233 = vst [vmem:[#allocation2 + $0x60] sm:$0xff] %v229
    %234 = vst [vmem:[#allocation2 + $0x68] sm:$0xff] %v230
    %235 = vst [vmem:[#allocation2 + $0x70] sm:$0xff] %v231
    %236 = vst [vmem:[#allocation2 + $0x78] sm:$0xff] %v232
    %s237 = scalar_lea.vmem [#allocation4], 4
    %v238 = vld [vmem:[%s237] ss:$8 sm:$0xf]
    %v240 = vlaneseq
    %v241 = vshrl.u32 %v240, 7
    %v242 = vsub.s32 0, %v241
    %v243 = vrot.slane %v238, %v242
    %v244 = vlaneseq
    %v245 = vshrl.u32 %v244, 7
    %v246 = vsub.s32 1, %v245
    %v247 = vrot.slane %v238, %v246
    %v248 = vlaneseq
    %v249 = vshrl.u32 %v248, 7
    %v250 = vsub.s32 2, %v249
    %v251 = vrot.slane %v238, %v250
    %v252 = vlaneseq
    %v253 = vshrl.u32 %v252, 7
    %v254 = vsub.s32 3, %v253
    %v255 = vrot.slane %v238, %v254
    %v260 = vmul.f32 %v56, %v243
    %v261 = vmul.f32 %v57, %v247
    %v262 = vmul.f32 %v58, %v251
    %v263 = vmul.f32 %v59, %v255
    %264 = vst [vmem:[#allocation2 + $0x80] sm:$0xff] %v260
    %265 = vst [vmem:[#allocation2 + $0x88] sm:$0xff] %v261
    %266 = vst [vmem:[#allocation2 + $0x90] sm:$0xff] %v262
    %267 = vst [vmem:[#allocation2 + $0x98] sm:$0xff] %v263
    %268 = vrot.lane.b32.xlu0 %v56, 127
    %v269 = vpop.permute.xlu0 %268
    %270 = vrot.lane.b32.xlu0 %v57, 127
    %v271 = vpop.permute.xlu0 %270
    %272 = vrot.lane.b32.xlu0 %v58, 127
    %v273 = vpop.permute.xlu0 %272
    %274 = vrot.lane.b32.xlu0 %v59, 127
    %v275 = vpop.permute.xlu0 %274
    %vm276 = vcmp.lt.s32.totalorder %v69, 127
    %v277 = vsel %vm276, %v273, %v275
    %v278 = vsel %vm276, %v271, %v273
    %v279 = vsel %vm276, %v269, %v271
    %v280 = vsel %vm276, %v275, %v269
    %s281 = scalar_lea.vmem [#allocation4], 5
    %v282 = vld [vmem:[%s281] ss:$8 sm:$0xf]
    %v284 = vlaneseq
    %v285 = vshrl.u32 %v284, 7
    %v286 = vsub.s32 0, %v285
    %v287 = vrot.slane %v282, %v286
    %v288 = vlaneseq
    %v289 = vshrl.u32 %v288, 7
    %v290 = vsub.s32 1, %v289
    %v291 = vrot.slane %v282, %v290
    %v292 = vlaneseq
    %v293 = vshrl.u32 %v292, 7
    %v294 = vsub.s32 2, %v293
    %v295 = vrot.slane %v282, %v294
    %v296 = vlaneseq
    %v297 = vshrl.u32 %v296, 7
    %v298 = vsub.s32 3, %v297
    %v299 = vrot.slane %v282, %v298
    %v304 = vmul.f32 %v279, %v287
    %v305 = vmul.f32 %v278, %v291
    %v306 = vmul.f32 %v277, %v295
    %v307 = vmul.f32 %v280, %v299
    %308 = vst [vmem:[#allocation2 + $0xa0] sm:$0xff] %v304
    %309 = vst [vmem:[#allocation2 + $0xa8] sm:$0xff] %v305
    %310 = vst [vmem:[#allocation2 + $0xb0] sm:$0xff] %v306
    %311 = vst [vmem:[#allocation2 + $0xb8] sm:$0xff] %v307
    %312 = vrot.lane.b32.xlu0 %v56, 113
    %v313 = vpop.permute.xlu0 %312
    %314 = vrot.lane.b32.xlu0 %v57, 113
    %v315 = vpop.permute.xlu0 %314
    %316 = vrot.lane.b32.xlu0 %v58, 113
    %v317 = vpop.permute.xlu0 %316
    %318 = vrot.lane.b32.xlu0 %v59, 113
    %v319 = vpop.permute.xlu0 %318
    %vm320 = vcmp.lt.s32.totalorder %v69, 113
    %v321 = vsel %vm320, %v317, %v319
    %v322 = vsel %vm320, %v315, %v317
    %v323 = vsel %vm320, %v313, %v315
    %v324 = vsel %vm320, %v319, %v313
    %s325 = scalar_lea.vmem [#allocation4], 6
    %v326 = vld [vmem:[%s325] ss:$8 sm:$0xf]
    %v328 = vlaneseq
    %v329 = vshrl.u32 %v328, 7
    %v330 = vsub.s32 0, %v329
    %v331 = vrot.slane %v326, %v330
    %v332 = vlaneseq
    %v333 = vshrl.u32 %v332, 7
    %v334 = vsub.s32 1, %v333
    %v335 = vrot.slane %v326, %v334
    %v336 = vlaneseq
    %v337 = vshrl.u32 %v336, 7
    %v338 = vsub.s32 2, %v337
    %v339 = vrot.slane %v326, %v338
    %v340 = vlaneseq
    %v341 = vshrl.u32 %v340, 7
    %v342 = vsub.s32 3, %v341
    %v343 = vrot.slane %v326, %v342
    %v348 = vmul.f32 %v323, %v331
    %v349 = vmul.f32 %v322, %v335
    %v350 = vmul.f32 %v321, %v339
    %v351 = vmul.f32 %v324, %v343
    %352 = vst [vmem:[#allocation2 + $0xc0] sm:$0xff] %v348
    %353 = vst [vmem:[#allocation2 + $0xc8] sm:$0xff] %v349
    %354 = vst [vmem:[#allocation2 + $0xd0] sm:$0xff] %v350
    %355 = vst [vmem:[#allocation2 + $0xd8] sm:$0xff] %v351
    %356 = vrot.lane.b32.xlu0 %v56, 112
    %v357 = vpop.permute.xlu0 %356
    %358 = vrot.lane.b32.xlu0 %v57, 112
    %v359 = vpop.permute.xlu0 %358
    %360 = vrot.lane.b32.xlu0 %v58, 112
    %v361 = vpop.permute.xlu0 %360
    %362 = vrot.lane.b32.xlu0 %v59, 112
    %v363 = vpop.permute.xlu0 %362
    %vm364 = vcmp.lt.s32.totalorder %v69, 112
    %v365 = vsel %vm364, %v361, %v363
    %v366 = vsel %vm364, %v359, %v361
    %v367 = vsel %vm364, %v357, %v359
    %v368 = vsel %vm364, %v363, %v357
    %s369 = scalar_lea.vmem [#allocation4], 7
    %v370 = vld [vmem:[%s369] ss:$8 sm:$0xf]
    %v372 = vlaneseq
    %v373 = vshrl.u32 %v372, 7
    %v374 = vsub.s32 0, %v373
    %v375 = vrot.slane %v370, %v374
    %v376 = vlaneseq
    %v377 = vshrl.u32 %v376, 7
    %v378 = vsub.s32 1, %v377
    %v379 = vrot.slane %v370, %v378
    %v380 = vlaneseq
    %v381 = vshrl.u32 %v380, 7
    %v382 = vsub.s32 2, %v381
    %v383 = vrot.slane %v370, %v382
    %v384 = vlaneseq
    %v385 = vshrl.u32 %v384, 7
    %v386 = vsub.s32 3, %v385
    %v387 = vrot.slane %v370, %v386
    %v392 = vmul.f32 %v367, %v375
    %v393 = vmul.f32 %v366, %v379
    %v394 = vmul.f32 %v365, %v383
    %v395 = vmul.f32 %v368, %v387
    %396 = vst [vmem:[#allocation2 + $0xe0] sm:$0xff] %v392
    %397 = vst [vmem:[#allocation2 + $0xe8] sm:$0xff] %v393
    %398 = vst [vmem:[#allocation2 + $0xf0] sm:$0xff] %v394
    %399 = vst [vmem:[#allocation2 + $0xf8] sm:$0xff] %v395
    %400 = vrot.lane.b32.xlu0 %v56, 111
    %v401 = vpop.permute.xlu0 %400
    %402 = vrot.lane.b32.xlu0 %v57, 111
    %v403 = vpop.permute.xlu0 %402
    %404 = vrot.lane.b32.xlu0 %v58, 111
    %v405 = vpop.permute.xlu0 %404
    %406 = vrot.lane.b32.xlu0 %v59, 111
    %v407 = vpop.permute.xlu0 %406
    %vm408 = vcmp.lt.s32.totalorder %v69, 111
    %v409 = vsel %vm408, %v405, %v407
    %v410 = vsel %vm408, %v403, %v405
    %v411 = vsel %vm408, %v401, %v403
    %v412 = vsel %vm408, %v407, %v401
    %s413 = scalar_lea.vmem [#allocation4], 32
    %v414 = vld [vmem:[%s413] ss:$8 sm:$0xf]
    %v416 = vlaneseq
    %v417 = vshrl.u32 %v416, 7
    %v418 = vsub.s32 0, %v417
    %v419 = vrot.slane %v414, %v418
    %v420 = vlaneseq
    %v421 = vshrl.u32 %v420, 7
    %v422 = vsub.s32 1, %v421
    %v423 = vrot.slane %v414, %v422
    %v424 = vlaneseq
    %v425 = vshrl.u32 %v424, 7
    %v426 = vsub.s32 2, %v425
    %v427 = vrot.slane %v414, %v426
    %v428 = vlaneseq
    %v429 = vshrl.u32 %v428, 7
    %v430 = vsub.s32 3, %v429
    %v431 = vrot.slane %v414, %v430
    %v436 = vmul.f32 %v411, %v419
    %v437 = vmul.f32 %v410, %v423
    %v438 = vmul.f32 %v409, %v427
    %v439 = vmul.f32 %v412, %v431
    %440 = vst [vmem:[#allocation2 + $0x100] sm:$0xff] %v436
    %441 = vst [vmem:[#allocation2 + $0x108] sm:$0xff] %v437
    %442 = vst [vmem:[#allocation2 + $0x110] sm:$0xff] %v438
    %443 = vst [vmem:[#allocation2 + $0x118] sm:$0xff] %v439
    %v444 = vld [vmem:[%s2] sm:$0xff]
    %v445 = vld [vmem:[#allocation2] sm:$0xff]
    %v446 = vld [vmem:[#allocation2 + $0x8] sm:$0xff]
    %v447 = vld [vmem:[#allocation2 + $0x10] sm:$0xff]
    %v448 = vld [vmem:[#allocation2 + $0x18] sm:$0xff]
    %v449 = vld [vmem:[#allocation2 + $0x20] sm:$0xff]
    %v450 = vld [vmem:[#allocation2 + $0x28] sm:$0xff]
    %v451 = vld [vmem:[#allocation2 + $0x30] sm:$0xff]
    %v452 = vld [vmem:[#allocation2 + $0x38] sm:$0xff]
    %v453 = vld [vmem:[#allocation2 + $0x40] sm:$0xff]
    %v454 = vld [vmem:[#allocation2 + $0x48] sm:$0xff]
    %v455 = vld [vmem:[#allocation2 + $0x50] sm:$0xff]
    %v456 = vld [vmem:[#allocation2 + $0x58] sm:$0xff]
    %v457 = vld [vmem:[#allocation2 + $0x60] sm:$0xff]
    %v458 = vld [vmem:[#allocation2 + $0x68] sm:$0xff]
    %v459 = vld [vmem:[#allocation2 + $0x70] sm:$0xff]
    %v460 = vld [vmem:[#allocation2 + $0x78] sm:$0xff]
    %v461 = vld [vmem:[#allocation2 + $0x80] sm:$0xff]
    %v462 = vld [vmem:[#allocation2 + $0x88] sm:$0xff]
    %v463 = vld [vmem:[#allocation2 + $0x90] sm:$0xff]
    %v464 = vld [vmem:[#allocation2 + $0x98] sm:$0xff]
    %v465 = vld [vmem:[#allocation2 + $0xa0] sm:$0xff]
    %v466 = vld [vmem:[#allocation2 + $0xa8] sm:$0xff]
    %v467 = vld [vmem:[#allocation2 + $0xb0] sm:$0xff]
    %v468 = vld [vmem:[#allocation2 + $0xb8] sm:$0xff]
    %v469 = vld [vmem:[#allocation2 + $0xc0] sm:$0xff]
    %v470 = vld [vmem:[#allocation2 + $0xc8] sm:$0xff]
    %v471 = vld [vmem:[#allocation2 + $0xd0] sm:$0xff]
    %v472 = vld [vmem:[#allocation2 + $0xd8] sm:$0xff]
    %v473 = vld [vmem:[#allocation2 + $0xe0] sm:$0xff]
    %v474 = vld [vmem:[#allocation2 + $0xe8] sm:$0xff]
    %v475 = vld [vmem:[#allocation2 + $0xf0] sm:$0xff]
    %v476 = vld [vmem:[#allocation2 + $0xf8] sm:$0xff]
    %v477 = vld [vmem:[#allocation2 + $0x100] sm:$0xff]
    %v478 = vld [vmem:[#allocation2 + $0x108] sm:$0xff]
    %v479 = vld [vmem:[#allocation2 + $0x110] sm:$0xff]
    %v480 = vld [vmem:[#allocation2 + $0x118] sm:$0xff]
    %vm481 = vcmask 588800
    %v483 = vsel %vm481, %v444, 0
    %485 = vmatprep.subr.mxu0 %v446
    %486 = vmatpush1.msra.mxu0 %v445
    %487 = vmatprep.subr.mxu0 %v450
    %488 = vmatpush1.msra.mxu0 %v449
    %489 = vmatprep.subr.mxu0 %v454
    %490 = vmatpush1.msra.mxu0 %v453
    %491 = vmatprep.subr.mxu0 %v458
    %492 = vmatpush1.msra.mxu0 %v457
    %493 = vmatprep.subr.mxu0 %v462
    %494 = vmatpush1.msra.mxu0 %v461
    %495 = vmatprep.subr.mxu0 %v466
    %496 = vmatpush1.msra.mxu0 %v465
    %497 = vmatprep.subr.mxu0 %v470
    %498 = vmatpush1.msra.mxu0 %v469
    %499 = vmatprep.subr.mxu0 %v474
    %500 = vmatpush1.msra.mxu0 %v473
    %501 = vmatprep.subr.mxu0 %v478
    %502 = vmatpush1.msra.mxu0 %v477
    %503 = vmatprep.subr.mxu0 0.0
    %504 = vmatpush1.msra.mxu0 0.0
    %505 = vmatprep.subr.mxu0 0.0
    %506 = vmatpush1.msra.mxu0 0.0
    %507 = vmatprep.subr.mxu0 0.0
    %508 = vmatpush1.msra.mxu0 0.0
    %509 = vmatprep.subr.mxu0 0.0
    %510 = vmatpush1.msra.mxu0 0.0
    %511 = vmatprep.subr.mxu0 0.0
    %512 = vmatpush1.msra.mxu0 0.0
    %513 = vmatprep.subr.mxu0 0.0
    %514 = vmatpush1.msra.mxu0 0.0
    %515 = vmatprep.subr.mxu0 0.0
    %516 = vmatpush1.msra.mxu0 0.0
    %517 = vmatprep.subr.mxu0 0.0
    %518 = vmatpush1.msra.mxu0 0.0
    %519 = vmatprep.subr.mxu0 0.0
    %520 = vmatpush1.msra.mxu0 0.0
    %521 = vmatprep.subr.mxu0 0.0
    %522 = vmatpush1.msra.mxu0 0.0
    %523 = vmatprep.subr.mxu0 0.0
    %524 = vmatpush1.msra.mxu0 0.0
    %525 = vmatprep.subr.mxu0 0.0
    %526 = vmatpush1.msra.mxu0 0.0
    %527 = vmatprep.subr.mxu0 0.0
    %528 = vmatpush1.msra.mxu0 0.0
    %529 = vmatprep.subr.mxu0 0.0
    %530 = vmatpush1.msra.mxu0 0.0
    %531 = vmatprep.subr.mxu0 0.0
    %532 = vmatpush1.msra.mxu0 0.0
    %533 = vmatprep.subr.mxu0 0.0
    %534 = vmatpush1.msra.mxu0 0.0
    %535 = vmatprep.subr.mxu0 0.0
    %536 = vmatpush1.msra.mxu0 0.0
    %537 = vmatprep.subr.mxu0 0.0
    %538 = vmatpush1.msra.mxu0 0.0
    %539 = vmatprep.subr.mxu0 0.0
    %540 = vmatpush1.msra.mxu0 0.0
    %541 = vmatprep.subr.mxu0 0.0
    %542 = vmatpush1.msra.mxu0 0.0
    %543 = vmatprep.subr.mxu0 0.0
    %544 = vmatpush1.msra.mxu0 0.0
    %545 = vmatprep.subr.mxu0 0.0
    %546 = vmatpush1.msra.mxu0 0.0
    %547 = vmatprep.subr.mxu0 0.0
    %548 = vmatpush1.msra.mxu0 0.0
    %549 = vmatprep.mubr.f32.mxu0 0.0
    %550 = vmatmul.mubr.f32.gmra.mrb[0].mxu0 %v483
    %v551 = vpop.f32.mrb[0].mxu0
    %v552 = vadd.f32 0.0, %v551
    %v553 = vpop.f32.mrb[0].mxu0
    %v554 = vadd.f32 0.0, %v553
    %555 = vdwg.mxu0
    %556 = vmatprep.subr.mxu0 %v448
    %557 = vmatpush1.msra.mxu0 %v447
    %558 = vmatprep.subr.mxu0 %v452
    %559 = vmatpush1.msra.mxu0 %v451
    %560 = vmatprep.subr.mxu0 %v456
    %561 = vmatpush1.msra.mxu0 %v455
    %562 = vmatprep.subr.mxu0 %v460
    %563 = vmatpush1.msra.mxu0 %v459
    %564 = vmatprep.subr.mxu0 %v464
    %565 = vmatpush1.msra.mxu0 %v463
    %566 = vmatprep.subr.mxu0 %v468
    %567 = vmatpush1.msra.mxu0 %v467
    %568 = vmatprep.subr.mxu0 %v472
    %569 = vmatpush1.msra.mxu0 %v471
    %570 = vmatprep.subr.mxu0 %v476
    %571 = vmatpush1.msra.mxu0 %v475
    %572 = vmatprep.subr.mxu0 %v480
    %573 = vmatpush1.msra.mxu0 %v479
    %574 = vmatprep.subr.mxu0 0.0
    %575 = vmatpush1.msra.mxu0 0.0
    %576 = vmatprep.subr.mxu0 0.0
    %577 = vmatpush1.msra.mxu0 0.0
    %578 = vmatprep.subr.mxu0 0.0
    %579 = vmatpush1.msra.mxu0 0.0
    %580 = vmatprep.subr.mxu0 0.0
    %581 = vmatpush1.msra.mxu0 0.0
    %582 = vmatprep.subr.mxu0 0.0
    %583 = vmatpush1.msra.mxu0 0.0
    %584 = vmatprep.subr.mxu0 0.0
    %585 = vmatpush1.msra.mxu0 0.0
    %586 = vmatprep.subr.mxu0 0.0
    %587 = vmatpush1.msra.mxu0 0.0
    %588 = vmatprep.subr.mxu0 0.0
    %589 = vmatpush1.msra.mxu0 0.0
    %590 = vmatprep.subr.mxu0 0.0
    %591 = vmatpush1.msra.mxu0 0.0
    %592 = vmatprep.subr.mxu0 0.0
    %593 = vmatpush1.msra.mxu0 0.0
    %594 = vmatprep.subr.mxu0 0.0
    %595 = vmatpush1.msra.mxu0 0.0
    %596 = vmatprep.subr.mxu0 0.0
    %597 = vmatpush1.msra.mxu0 0.0
    %598 = vmatprep.subr.mxu0 0.0
    %599 = vmatpush1.msra.mxu0 0.0
    %600 = vmatprep.subr.mxu0 0.0
    %601 = vmatpush1.msra.mxu0 0.0
    %602 = vmatprep.subr.mxu0 0.0
    %603 = vmatpush1.msra.mxu0 0.0
    %604 = vmatprep.subr.mxu0 0.0
    %605 = vmatpush1.msra.mxu0 0.0
    %606 = vmatprep.subr.mxu0 0.0
    %607 = vmatpush1.msra.mxu0 0.0
    %608 = vmatprep.subr.mxu0 0.0
    %609 = vmatpush1.msra.mxu0 0.0
    %610 = vmatprep.subr.mxu0 0.0
    %611 = vmatpush1.msra.mxu0 0.0
    %612 = vmatprep.subr.mxu0 0.0
    %613 = vmatpush1.msra.mxu0 0.0
    %614 = vmatprep.subr.mxu0 0.0
    %615 = vmatpush1.msra.mxu0 0.0
    %616 = vmatprep.subr.mxu0 0.0
    %617 = vmatpush1.msra.mxu0 0.0
    %618 = vmatprep.subr.mxu0 0.0
    %619 = vmatpush1.msra.mxu0 0.0
    %620 = vmatprep.mubr.f32.mxu0 0.0
    %621 = vmatmul.mubr.f32.gmra.mrb[0].mxu0 %v483
    %v622 = vpop.f32.mrb[0].mxu0
    %v623 = vadd.f32 0.0, %v622
    %v624 = vpop.f32.mrb[0].mxu0
    %v625 = vadd.f32 0.0, %v624
    %626 = vdwg.mxu0
    %v627 = vld [vmem:[%s4] sm:$0xff]
    %629 = vset.pattern.permute.xlu0 0
    %630 = vperm.xlu0 %629, %v627
    %v631 = vpop.permute.xlu0 %630
    %v633 = vmul.f32 %v552, %v631
    %v634 = vmul.f32 %v554, %v631
    %v635 = vmul.f32 %v623, %v631
    %v636 = vmul.f32 %v625, %v631
    %v637 = vld [vmem:[%s5] sm:$0xff]
    %639 = vset.pattern.permute.xlu0 0
    %640 = vperm.xlu0 %639, %v637
    %v641 = vpop.permute.xlu0 %640
    %v643 = vadd.f32 %v633, %v641
    %v644 = vadd.f32 %v634, %v641
    %v645 = vadd.f32 %v635, %v641
    %v646 = vadd.f32 %v636, %v641
    %v647 = vmax.f32 %v643, 0.0
    %v648 = vmax.f32 %v644, 0.0
    %v649 = vmax.f32 %v645, 0.0
    %v650 = vmax.f32 %v646, 0.0
    %651 = vrot.lane.b32.xlu0 %v647, 17
    %v652 = vpop.permute.xlu0 %651
    %653 = vrot.lane.b32.xlu0 %v648, 17
    %v654 = vpop.permute.xlu0 %653
    %655 = vrot.lane.b32.xlu0 %v649, 17
    %v656 = vpop.permute.xlu0 %655
    %657 = vrot.lane.b32.xlu0 %v650, 17
    %v658 = vpop.permute.xlu0 %657
    %v659 = vsel %vm70, %v656, %v658
    %v660 = vsel %vm70, %v654, %v656
    %v661 = vsel %vm70, %v652, %v654
    %v662 = vsel %vm70, %v658, %v652
    %v663 = vld [vmem:[#allocation4] ss:$8 sm:$0xf]
    %v665 = vlaneseq
    %v666 = vshrl.u32 %v665, 7
    %v667 = vsub.s32 0, %v666
    %v668 = vrot.slane %v663, %v667
    %v669 = vlaneseq
    %v670 = vshrl.u32 %v669, 7
    %v671 = vsub.s32 1, %v670
    %v672 = vrot.slane %v663, %v671
    %v673 = vlaneseq
    %v674 = vshrl.u32 %v673, 7
    %v675 = vsub.s32 2, %v674
    %v676 = vrot.slane %v663, %v675
    %v677 = vlaneseq
    %v678 = vshrl.u32 %v677, 7
    %v679 = vsub.s32 3, %v678
    %v680 = vrot.slane %v663, %v679
    %v685 = vmul.f32 %v662, %v668
    %v686 = vmul.f32 %v661, %v672
    %v687 = vmul.f32 %v660, %v676
    %v688 = vmul.f32 %v659, %v680
    %689 = vst [vmem:[#allocation3] sm:$0xff] %v685
    %690 = vst [vmem:[#allocation3 + $0x8] sm:$0xff] %v686
    %691 = vst [vmem:[#allocation3 + $0x10] sm:$0xff] %v687
    %692 = vst [vmem:[#allocation3 + $0x18] sm:$0xff] %v688
    %693 = vrot.lane.b32.xlu0 %v647, 16
    %v694 = vpop.permute.xlu0 %693
    %695 = vrot.lane.b32.xlu0 %v648, 16
    %v696 = vpop.permute.xlu0 %695
    %697 = vrot.lane.b32.xlu0 %v649, 16
    %v698 = vpop.permute.xlu0 %697
    %699 = vrot.lane.b32.xlu0 %v650, 16
    %v700 = vpop.permute.xlu0 %699
    %v701 = vsel %vm113, %v698, %v700
    %v702 = vsel %vm113, %v696, %v698
    %v703 = vsel %vm113, %v694, %v696
    %v704 = vsel %vm113, %v700, %v694
    %v705 = vld [vmem:[%s118] ss:$8 sm:$0xf]
    %v707 = vlaneseq
    %v708 = vshrl.u32 %v707, 7
    %v709 = vsub.s32 0, %v708
    %v710 = vrot.slane %v705, %v709
    %v711 = vlaneseq
    %v712 = vshrl.u32 %v711, 7
    %v713 = vsub.s32 1, %v712
    %v714 = vrot.slane %v705, %v713
    %v715 = vlaneseq
    %v716 = vshrl.u32 %v715, 7
    %v717 = vsub.s32 2, %v716
    %v718 = vrot.slane %v705, %v717
    %v719 = vlaneseq
    %v720 = vshrl.u32 %v719, 7
    %v721 = vsub.s32 3, %v720
    %v722 = vrot.slane %v705, %v721
    %v727 = vmul.f32 %v704, %v710
    %v728 = vmul.f32 %v703, %v714
    %v729 = vmul.f32 %v702, %v718
    %v730 = vmul.f32 %v701, %v722
    %731 = vst [vmem:[#allocation3 + $0x20] sm:$0xff] %v727
    %732 = vst [vmem:[#allocation3 + $0x28] sm:$0xff] %v728
    %733 = vst [vmem:[#allocation3 + $0x30] sm:$0xff] %v729
    %734 = vst [vmem:[#allocation3 + $0x38] sm:$0xff] %v730
    %735 = vrot.lane.b32.xlu0 %v647, 15
    %v736 = vpop.permute.xlu0 %735
    %737 = vrot.lane.b32.xlu0 %v648, 15
    %v738 = vpop.permute.xlu0 %737
    %739 = vrot.lane.b32.xlu0 %v649, 15
    %v740 = vpop.permute.xlu0 %739
    %741 = vrot.lane.b32.xlu0 %v650, 15
    %v742 = vpop.permute.xlu0 %741
    %v743 = vsel %vm157, %v740, %v742
    %v744 = vsel %vm157, %v738, %v740
    %v745 = vsel %vm157, %v736, %v738
    %v746 = vsel %vm157, %v742, %v736
    %v747 = vld [vmem:[%s162] ss:$8 sm:$0xf]
    %v749 = vlaneseq
    %v750 = vshrl.u32 %v749, 7
    %v751 = vsub.s32 0, %v750
    %v752 = vrot.slane %v747, %v751
    %v753 = vlaneseq
    %v754 = vshrl.u32 %v753, 7
    %v755 = vsub.s32 1, %v754
    %v756 = vrot.slane %v747, %v755
    %v757 = vlaneseq
    %v758 = vshrl.u32 %v757, 7
    %v759 = vsub.s32 2, %v758
    %v760 = vrot.slane %v747, %v759
    %v761 = vlaneseq
    %v762 = vshrl.u32 %v761, 7
    %v763 = vsub.s32 3, %v762
    %v764 = vrot.slane %v747, %v763
    %v769 = vmul.f32 %v746, %v752
    %v770 = vmul.f32 %v745, %v756
    %v771 = vmul.f32 %v744, %v760
    %v772 = vmul.f32 %v743, %v764
    %773 = vst [vmem:[#allocation3 + $0x40] sm:$0xff] %v769
    %774 = vst [vmem:[#allocation3 + $0x48] sm:$0xff] %v770
    %775 = vst [vmem:[#allocation3 + $0x50] sm:$0xff] %v771
    %776 = vst [vmem:[#allocation3 + $0x58] sm:$0xff] %v772
    %777 = vrot.lane.b32.xlu0 %v647, 1
    %v778 = vpop.permute.xlu0 %777
    %779 = vrot.lane.b32.xlu0 %v648, 1
    %v780 = vpop.permute.xlu0 %779
    %781 = vrot.lane.b32.xlu0 %v649, 1
    %v782 = vpop.permute.xlu0 %781
    %783 = vrot.lane.b32.xlu0 %v650, 1
    %v784 = vpop.permute.xlu0 %783
    %v785 = vsel %vm201, %v782, %v784
    %v786 = vsel %vm201, %v780, %v782
    %v787 = vsel %vm201, %v778, %v780
    %v788 = vsel %vm201, %v784, %v778
    %v789 = vld [vmem:[%s206] ss:$8 sm:$0xf]
    %v791 = vlaneseq
    %v792 = vshrl.u32 %v791, 7
    %v793 = vsub.s32 0, %v792
    %v794 = vrot.slane %v789, %v793
    %v795 = vlaneseq
    %v796 = vshrl.u32 %v795, 7
    %v797 = vsub.s32 1, %v796
    %v798 = vrot.slane %v789, %v797
    %v799 = vlaneseq
    %v800 = vshrl.u32 %v799, 7
    %v801 = vsub.s32 2, %v800
    %v802 = vrot.slane %v789, %v801
    %v803 = vlaneseq
    %v804 = vshrl.u32 %v803, 7
    %v805 = vsub.s32 3, %v804
    %v806 = vrot.slane %v789, %v805
    %v811 = vmul.f32 %v788, %v794
    %v812 = vmul.f32 %v787, %v798
    %v813 = vmul.f32 %v786, %v802
    %v814 = vmul.f32 %v785, %v806
    %815 = vst [vmem:[#allocation3 + $0x60] sm:$0xff] %v811
    %816 = vst [vmem:[#allocation3 + $0x68] sm:$0xff] %v812
    %817 = vst [vmem:[#allocation3 + $0x70] sm:$0xff] %v813
    %818 = vst [vmem:[#allocation3 + $0x78] sm:$0xff] %v814
    %v819 = vld [vmem:[%s237] ss:$8 sm:$0xf]
    %v821 = vlaneseq
    %v822 = vshrl.u32 %v821, 7
    %v823 = vsub.s32 0, %v822
    %v824 = vrot.slane %v819, %v823
    %v825 = vlaneseq
    %v826 = vshrl.u32 %v825, 7
    %v827 = vsub.s32 1, %v826
    %v828 = vrot.slane %v819, %v827
    %v829 = vlaneseq
    %v830 = vshrl.u32 %v829, 7
    %v831 = vsub.s32 2, %v830
    %v832 = vrot.slane %v819, %v831
    %v833 = vlaneseq
    %v834 = vshrl.u32 %v833, 7
    %v835 = vsub.s32 3, %v834
    %v836 = vrot.slane %v819, %v835
    %v841 = vmul.f32 %v647, %v824
    %v842 = vmul.f32 %v648, %v828
    %v843 = vmul.f32 %v649, %v832
    %v844 = vmul.f32 %v650, %v836
    %845 = vst [vmem:[#allocation3 + $0x80] sm:$0xff] %v841
    %846 = vst [vmem:[#allocation3 + $0x88] sm:$0xff] %v842
    %847 = vst [vmem:[#allocation3 + $0x90] sm:$0xff] %v843
    %848 = vst [vmem:[#allocation3 + $0x98] sm:$0xff] %v844
    %849 = vrot.lane.b32.xlu0 %v647, 127
    %v850 = vpop.permute.xlu0 %849
    %851 = vrot.lane.b32.xlu0 %v648, 127
    %v852 = vpop.permute.xlu0 %851
    %853 = vrot.lane.b32.xlu0 %v649, 127
    %v854 = vpop.permute.xlu0 %853
    %855 = vrot.lane.b32.xlu0 %v650, 127
    %v856 = vpop.permute.xlu0 %855
    %v857 = vsel %vm276, %v854, %v856
    %v858 = vsel %vm276, %v852, %v854
    %v859 = vsel %vm276, %v850, %v852
    %v860 = vsel %vm276, %v856, %v850
    %v861 = vld [vmem:[%s281] ss:$8 sm:$0xf]
    %v863 = vlaneseq
    %v864 = vshrl.u32 %v863, 7
    %v865 = vsub.s32 0, %v864
    %v866 = vrot.slane %v861, %v865
    %v867 = vlaneseq
    %v868 = vshrl.u32 %v867, 7
    %v869 = vsub.s32 1, %v868
    %v870 = vrot.slane %v861, %v869
    %v871 = vlaneseq
    %v872 = vshrl.u32 %v871, 7
    %v873 = vsub.s32 2, %v872
    %v874 = vrot.slane %v861, %v873
    %v875 = vlaneseq
    %v876 = vshrl.u32 %v875, 7
    %v877 = vsub.s32 3, %v876
    %v878 = vrot.slane %v861, %v877
    %v883 = vmul.f32 %v859, %v866
    %v884 = vmul.f32 %v858, %v870
    %v885 = vmul.f32 %v857, %v874
    %v886 = vmul.f32 %v860, %v878
    %887 = vst [vmem:[#allocation3 + $0xa0] sm:$0xff] %v883
    %888 = vst [vmem:[#allocation3 + $0xa8] sm:$0xff] %v884
    %889 = vst [vmem:[#allocation3 + $0xb0] sm:$0xff] %v885
    %890 = vst [vmem:[#allocation3 + $0xb8] sm:$0xff] %v886
    %891 = vrot.lane.b32.xlu0 %v647, 113
    %v892 = vpop.permute.xlu0 %891
    %893 = vrot.lane.b32.xlu0 %v648, 113
    %v894 = vpop.permute.xlu0 %893
    %895 = vrot.lane.b32.xlu0 %v649, 113
    %v896 = vpop.permute.xlu0 %895
    %897 = vrot.lane.b32.xlu0 %v650, 113
    %v898 = vpop.permute.xlu0 %897
    %v899 = vsel %vm320, %v896, %v898
    %v900 = vsel %vm320, %v894, %v896
    %v901 = vsel %vm320, %v892, %v894
    %v902 = vsel %vm320, %v898, %v892
    %v903 = vld [vmem:[%s325] ss:$8 sm:$0xf]
    %v905 = vlaneseq
    %v906 = vshrl.u32 %v905, 7
    %v907 = vsub.s32 0, %v906
    %v908 = vrot.slane %v903, %v907
    %v909 = vlaneseq
    %v910 = vshrl.u32 %v909, 7
    %v911 = vsub.s32 1, %v910
    %v912 = vrot.slane %v903, %v911
    %v913 = vlaneseq
    %v914 = vshrl.u32 %v913, 7
    %v915 = vsub.s32 2, %v914
    %v916 = vrot.slane %v903, %v915
    %v917 = vlaneseq
    %v918 = vshrl.u32 %v917, 7
    %v919 = vsub.s32 3, %v918
    %v920 = vrot.slane %v903, %v919
    %v925 = vmul.f32 %v901, %v908
    %v926 = vmul.f32 %v900, %v912
    %v927 = vmul.f32 %v899, %v916
    %v928 = vmul.f32 %v902, %v920
    %929 = vst [vmem:[#allocation3 + $0xc0] sm:$0xff] %v925
    %930 = vst [vmem:[#allocation3 + $0xc8] sm:$0xff] %v926
    %931 = vst [vmem:[#allocation3 + $0xd0] sm:$0xff] %v927
    %932 = vst [vmem:[#allocation3 + $0xd8] sm:$0xff] %v928
    %933 = vrot.lane.b32.xlu0 %v647, 112
    %v934 = vpop.permute.xlu0 %933
    %935 = vrot.lane.b32.xlu0 %v648, 112
    %v936 = vpop.permute.xlu0 %935
    %937 = vrot.lane.b32.xlu0 %v649, 112
    %v938 = vpop.permute.xlu0 %937
    %939 = vrot.lane.b32.xlu0 %v650, 112
    %v940 = vpop.permute.xlu0 %939
    %v941 = vsel %vm364, %v938, %v940
    %v942 = vsel %vm364, %v936, %v938
    %v943 = vsel %vm364, %v934, %v936
    %v944 = vsel %vm364, %v940, %v934
    %v945 = vld [vmem:[%s369] ss:$8 sm:$0xf]
    %v947 = vlaneseq
    %v948 = vshrl.u32 %v947, 7
    %v949 = vsub.s32 0, %v948
    %v950 = vrot.slane %v945, %v949
    %v951 = vlaneseq
    %v952 = vshrl.u32 %v951, 7
    %v953 = vsub.s32 1, %v952
    %v954 = vrot.slane %v945, %v953
    %v955 = vlaneseq
    %v956 = vshrl.u32 %v955, 7
    %v957 = vsub.s32 2, %v956
    %v958 = vrot.slane %v945, %v957
    %v959 = vlaneseq
    %v960 = vshrl.u32 %v959, 7
    %v961 = vsub.s32 3, %v960
    %v962 = vrot.slane %v945, %v961
    %v967 = vmul.f32 %v943, %v950
    %v968 = vmul.f32 %v942, %v954
    %v969 = vmul.f32 %v941, %v958
    %v970 = vmul.f32 %v944, %v962
    %971 = vst [vmem:[#allocation3 + $0xe0] sm:$0xff] %v967
    %972 = vst [vmem:[#allocation3 + $0xe8] sm:$0xff] %v968
    %973 = vst [vmem:[#allocation3 + $0xf0] sm:$0xff] %v969
    %974 = vst [vmem:[#allocation3 + $0xf8] sm:$0xff] %v970
    %975 = vrot.lane.b32.xlu0 %v647, 111
    %v976 = vpop.permute.xlu0 %975
    %977 = vrot.lane.b32.xlu0 %v648, 111
    %v978 = vpop.permute.xlu0 %977
    %979 = vrot.lane.b32.xlu0 %v649, 111
    %v980 = vpop.permute.xlu0 %979
    %981 = vrot.lane.b32.xlu0 %v650, 111
    %v982 = vpop.permute.xlu0 %981
    %v983 = vsel %vm408, %v980, %v982
    %v984 = vsel %vm408, %v978, %v980
    %v985 = vsel %vm408, %v976, %v978
    %v986 = vsel %vm408, %v982, %v976
    %v987 = vld [vmem:[%s413] ss:$8 sm:$0xf]
    %v989 = vlaneseq
    %v990 = vshrl.u32 %v989, 7
    %v991 = vsub.s32 0, %v990
    %v992 = vrot.slane %v987, %v991
    %v993 = vlaneseq
    %v994 = vshrl.u32 %v993, 7
    %v995 = vsub.s32 1, %v994
    %v996 = vrot.slane %v987, %v995
    %v997 = vlaneseq
    %v998 = vshrl.u32 %v997, 7
    %v999 = vsub.s32 2, %v998
    %v1000 = vrot.slane %v987, %v999
    %v1001 = vlaneseq
    %v1002 = vshrl.u32 %v1001, 7
    %v1003 = vsub.s32 3, %v1002
    %v1004 = vrot.slane %v987, %v1003
    %v1009 = vmul.f32 %v985, %v992
    %v1010 = vmul.f32 %v984, %v996
    %v1011 = vmul.f32 %v983, %v1000
    %v1012 = vmul.f32 %v986, %v1004
    %1013 = vst [vmem:[#allocation3 + $0x100] sm:$0xff] %v1009
    %1014 = vst [vmem:[#allocation3 + $0x108] sm:$0xff] %v1010
    %1015 = vst [vmem:[#allocation3 + $0x110] sm:$0xff] %v1011
    %1016 = vst [vmem:[#allocation3 + $0x118] sm:$0xff] %v1012
    %v1017 = vld [vmem:[#allocation7] sm:$0xff]
    %v1018 = vld [vmem:[#allocation3] sm:$0xff]
    %v1019 = vld [vmem:[#allocation3 + $0x8] sm:$0xff]
    %v1020 = vld [vmem:[#allocation3 + $0x10] sm:$0xff]
    %v1021 = vld [vmem:[#allocation3 + $0x18] sm:$0xff]
    %v1022 = vld [vmem:[#allocation3 + $0x20] sm:$0xff]
    %v1023 = vld [vmem:[#allocation3 + $0x28] sm:$0xff]
    %v1024 = vld [vmem:[#allocation3 + $0x30] sm:$0xff]
    %v1025 = vld [vmem:[#allocation3 + $0x38] sm:$0xff]
    %v1026 = vld [vmem:[#allocation3 + $0x40] sm:$0xff]
    %v1027 = vld [vmem:[#allocation3 + $0x48] sm:$0xff]
    %v1028 = vld [vmem:[#allocation3 + $0x50] sm:$0xff]
    %v1029 = vld [vmem:[#allocation3 + $0x58] sm:$0xff]
    %v1030 = vld [vmem:[#allocation3 + $0x60] sm:$0xff]
    %v1031 = vld [vmem:[#allocation3 + $0x68] sm:$0xff]
    %v1032 = vld [vmem:[#allocation3 + $0x70] sm:$0xff]
    %v1033 = vld [vmem:[#allocation3 + $0x78] sm:$0xff]
    %v1034 = vld [vmem:[#allocation3 + $0x80] sm:$0xff]
    %v1035 = vld [vmem:[#allocation3 + $0x88] sm:$0xff]
    %v1036 = vld [vmem:[#allocation3 + $0x90] sm:$0xff]
    %v1037 = vld [vmem:[#allocation3 + $0x98] sm:$0xff]
    %v1038 = vld [vmem:[#allocation3 + $0xa0] sm:$0xff]
    %v1039 = vld [vmem:[#allocation3 + $0xa8] sm:$0xff]
    %v1040 = vld [vmem:[#allocation3 + $0xb0] sm:$0xff]
    %v1041 = vld [vmem:[#allocation3 + $0xb8] sm:$0xff]
    %v1042 = vld [vmem:[#allocation3 + $0xc0] sm:$0xff]
    %v1043 = vld [vmem:[#allocation3 + $0xc8] sm:$0xff]
    %v1044 = vld [vmem:[#allocation3 + $0xd0] sm:$0xff]
    %v1045 = vld [vmem:[#allocation3 + $0xd8] sm:$0xff]
    %v1046 = vld [vmem:[#allocation3 + $0xe0] sm:$0xff]
    %v1047 = vld [vmem:[#allocation3 + $0xe8] sm:$0xff]
    %v1048 = vld [vmem:[#allocation3 + $0xf0] sm:$0xff]
    %v1049 = vld [vmem:[#allocation3 + $0xf8] sm:$0xff]
    %v1050 = vld [vmem:[#allocation3 + $0x100] sm:$0xff]
    %v1051 = vld [vmem:[#allocation3 + $0x108] sm:$0xff]
    %v1052 = vld [vmem:[#allocation3 + $0x110] sm:$0xff]
    %v1053 = vld [vmem:[#allocation3 + $0x118] sm:$0xff]
    %v1055 = vsel %vm481, %v1017, 0
    %1057 = vmatprep.subr.mxu0 %v1019
    %1058 = vmatpush1.msra.mxu0 %v1018
    %1059 = vmatprep.subr.mxu0 %v1023
    %1060 = vmatpush1.msra.mxu0 %v1022
    %1061 = vmatprep.subr.mxu0 %v1027
    %1062 = vmatpush1.msra.mxu0 %v1026
    %1063 = vmatprep.subr.mxu0 %v1031
    %1064 = vmatpush1.msra.mxu0 %v1030
    %1065 = vmatprep.subr.mxu0 %v1035
    %1066 = vmatpush1.msra.mxu0 %v1034
    %1067 = vmatprep.subr.mxu0 %v1039
    %1068 = vmatpush1.msra.mxu0 %v1038
    %1069 = vmatprep.subr.mxu0 %v1043
    %1070 = vmatpush1.msra.mxu0 %v1042
    %1071 = vmatprep.subr.mxu0 %v1047
    %1072 = vmatpush1.msra.mxu0 %v1046
    %1073 = vmatprep.subr.mxu0 %v1051
    %1074 = vmatpush1.msra.mxu0 %v1050
    %1075 = vmatprep.subr.mxu0 0.0
    %1076 = vmatpush1.msra.mxu0 0.0
    %1077 = vmatprep.subr.mxu0 0.0
    %1078 = vmatpush1.msra.mxu0 0.0
    %1079 = vmatprep.subr.mxu0 0.0
    %1080 = vmatpush1.msra.mxu0 0.0
    %1081 = vmatprep.subr.mxu0 0.0
    %1082 = vmatpush1.msra.mxu0 0.0
    %1083 = vmatprep.subr.mxu0 0.0
    %1084 = vmatpush1.msra.mxu0 0.0
    %1085 = vmatprep.subr.mxu0 0.0
    %1086 = vmatpush1.msra.mxu0 0.0
    %1087 = vmatprep.subr.mxu0 0.0
    %1088 = vmatpush1.msra.mxu0 0.0
    %1089 = vmatprep.subr.mxu0 0.0
    %1090 = vmatpush1.msra.mxu0 0.0
    %1091 = vmatprep.subr.mxu0 0.0
    %1092 = vmatpush1.msra.mxu0 0.0
    %1093 = vmatprep.subr.mxu0 0.0
    %1094 = vmatpush1.msra.mxu0 0.0
    %1095 = vmatprep.subr.mxu0 0.0
    %1096 = vmatpush1.msra.mxu0 0.0
    %1097 = vmatprep.subr.mxu0 0.0
    %1098 = vmatpush1.msra.mxu0 0.0
    %1099 = vmatprep.subr.mxu0 0.0
    %1100 = vmatpush1.msra.mxu0 0.0
    %1101 = vmatprep.subr.mxu0 0.0
    %1102 = vmatpush1.msra.mxu0 0.0
    %1103 = vmatprep.subr.mxu0 0.0
    %1104 = vmatpush1.msra.mxu0 0.0
    %1105 = vmatprep.subr.mxu0 0.0
    %1106 = vmatpush1.msra.mxu0 0.0
    %1107 = vmatprep.subr.mxu0 0.0
    %1108 = vmatpush1.msra.mxu0 0.0
    %1109 = vmatprep.subr.mxu0 0.0
    %1110 = vmatpush1.msra.mxu0 0.0
    %1111 = vmatprep.subr.mxu0 0.0
    %1112 = vmatpush1.msra.mxu0 0.0
    %1113 = vmatprep.subr.mxu0 0.0
    %1114 = vmatpush1.msra.mxu0 0.0
    %1115 = vmatprep.subr.mxu0 0.0
    %1116 = vmatpush1.msra.mxu0 0.0
    %1117 = vmatprep.subr.mxu0 0.0
    %1118 = vmatpush1.msra.mxu0 0.0
    %1119 = vmatprep.subr.mxu0 0.0
    %1120 = vmatpush1.msra.mxu0 0.0
    %1121 = vmatprep.mubr.f32.mxu0 0.0
    %1122 = vmatmul.mubr.f32.gmra.mrb[0].mxu0 %v1055
    %v1123 = vpop.f32.mrb[0].mxu0
    %v1124 = vadd.f32 0.0, %v1123
    %v1125 = vpop.f32.mrb[0].mxu0
    %v1126 = vadd.f32 0.0, %v1125
    %1127 = vdwg.mxu0
    %1128 = vmatprep.subr.mxu0 %v1021
    %1129 = vmatpush1.msra.mxu0 %v1020
    %1130 = vmatprep.subr.mxu0 %v1025
    %1131 = vmatpush1.msra.mxu0 %v1024
    %1132 = vmatprep.subr.mxu0 %v1029
    %1133 = vmatpush1.msra.mxu0 %v1028
    %1134 = vmatprep.subr.mxu0 %v1033
    %1135 = vmatpush1.msra.mxu0 %v1032
    %1136 = vmatprep.subr.mxu0 %v1037
    %1137 = vmatpush1.msra.mxu0 %v1036
    %1138 = vmatprep.subr.mxu0 %v1041
    %1139 = vmatpush1.msra.mxu0 %v1040
    %1140 = vmatprep.subr.mxu0 %v1045
    %1141 = vmatpush1.msra.mxu0 %v1044
    %1142 = vmatprep.subr.mxu0 %v1049
    %1143 = vmatpush1.msra.mxu0 %v1048
    %1144 = vmatprep.subr.mxu0 %v1053
    %1145 = vmatpush1.msra.mxu0 %v1052
    %1146 = vmatprep.subr.mxu0 0.0
    %1147 = vmatpush1.msra.mxu0 0.0
    %1148 = vmatprep.subr.mxu0 0.0
    %1149 = vmatpush1.msra.mxu0 0.0
    %1150 = vmatprep.subr.mxu0 0.0
    %1151 = vmatpush1.msra.mxu0 0.0
    %1152 = vmatprep.subr.mxu0 0.0
    %1153 = vmatpush1.msra.mxu0 0.0
    %1154 = vmatprep.subr.mxu0 0.0
    %1155 = vmatpush1.msra.mxu0 0.0
    %1156 = vmatprep.subr.mxu0 0.0
    %1157 = vmatpush1.msra.mxu0 0.0
    %1158 = vmatprep.subr.mxu0 0.0
    %1159 = vmatpush1.msra.mxu0 0.0
    %1160 = vmatprep.subr.mxu0 0.0
    %1161 = vmatpush1.msra.mxu0 0.0
    %1162 = vmatprep.subr.mxu0 0.0
    %1163 = vmatpush1.msra.mxu0 0.0
    %1164 = vmatprep.subr.mxu0 0.0
    %1165 = vmatpush1.msra.mxu0 0.0
    %1166 = vmatprep.subr.mxu0 0.0
    %1167 = vmatpush1.msra.mxu0 0.0
    %1168 = vmatprep.subr.mxu0 0.0
    %1169 = vmatpush1.msra.mxu0 0.0
    %1170 = vmatprep.subr.mxu0 0.0
    %1171 = vmatpush1.msra.mxu0 0.0
    %1172 = vmatprep.subr.mxu0 0.0
    %1173 = vmatpush1.msra.mxu0 0.0
    %1174 = vmatprep.subr.mxu0 0.0
    %1175 = vmatpush1.msra.mxu0 0.0
    %1176 = vmatprep.subr.mxu0 0.0
    %1177 = vmatpush1.msra.mxu0 0.0
    %1178 = vmatprep.subr.mxu0 0.0
    %1179 = vmatpush1.msra.mxu0 0.0
    %1180 = vmatprep.subr.mxu0 0.0
    %1181 = vmatpush1.msra.mxu0 0.0
    %1182 = vmatprep.subr.mxu0 0.0
    %1183 = vmatpush1.msra.mxu0 0.0
    %1184 = vmatprep.subr.mxu0 0.0
    %1185 = vmatpush1.msra.mxu0 0.0
    %1186 = vmatprep.subr.mxu0 0.0
    %1187 = vmatpush1.msra.mxu0 0.0
    %1188 = vmatprep.subr.mxu0 0.0
    %1189 = vmatpush1.msra.mxu0 0.0
    %1190 = vmatprep.subr.mxu0 0.0
    %1191 = vmatpush1.msra.mxu0 0.0
    %1192 = vmatprep.mubr.f32.mxu0 0.0
    %1193 = vmatmul.mubr.f32.gmra.mrb[0].mxu0 %v1055
    %v1194 = vpop.f32.mrb[0].mxu0
    %v1195 = vadd.f32 0.0, %v1194
    %v1196 = vpop.f32.mrb[0].mxu0
    %v1197 = vadd.f32 0.0, %v1196
    %1198 = vdwg.mxu0
    %v1199 = vld [vmem:[%s6] sm:$0xff]
    %1201 = vset.pattern.permute.xlu0 0
    %1202 = vperm.xlu0 %1201, %v1199
    %v1203 = vpop.permute.xlu0 %1202
    %v1205 = vmul.f32 %v1124, %v1203
    %v1206 = vmul.f32 %v1126, %v1203
    %v1207 = vmul.f32 %v1195, %v1203
    %v1208 = vmul.f32 %v1197, %v1203
    %v1209 = vld [vmem:[%s7] sm:$0xff]
    %1211 = vset.pattern.permute.xlu0 0
    %1212 = vperm.xlu0 %1211, %v1209
    %v1213 = vpop.permute.xlu0 %1212
    %v1215 = vadd.f32 %v1205, %v1213
    %v1216 = vadd.f32 %v1206, %v1213
    %v1217 = vadd.f32 %v1207, %v1213
    %v1218 = vadd.f32 %v1208, %v1213
    %v1219 = vadd.f32 %v56, %v1215
    %v1220 = vadd.f32 %v57, %v1216
    %v1221 = vadd.f32 %v58, %v1217
    %v1222 = vadd.f32 %v59, %v1218
    %v1223 = vmax.f32 %v1219, 0.0
    %v1224 = vmax.f32 %v1220, 0.0
    %v1225 = vmax.f32 %v1221, 0.0
    %v1226 = vmax.f32 %v1222, 0.0
    %1227 = vst [vmem:[#allocation9] sm:$0xff] %v1223
    %1228 = vst [vmem:[#allocation9 + $0x8] sm:$0xff] %v1224
    %1229 = vst [vmem:[#allocation9 + $0x10] sm:$0xff] %v1225
    %1230 = vst [vmem:[#allocation9 + $0x18] sm:$0xff] %v1226
    // Predicated region
    $region42: #{tpu_custom_call.1} parent=1 // pred_check
      _
    $region43: #{tpu_custom_call.1} parent=1 // pred_check_branch
      %1232 = sbr.rel (0) target = $region45
    $region44: #{tpu_custom_call.1} parent=1 // pred_region
      %s1234 = ssub.s32 512, 512
      %1235 = vsyncadd [#allocation6], %s1234
      %s1237 = sshll.u32 [#allocation9], 4
      %s1238 = int_to_ptr.vmem [resolvable:$true] %s1237
      %1240 = dma.vmem_to_hbm [thread:$0]  %s1238, 512, %s8, [#allocation6]
    $region45: #{tpu_custom_call.1} parent=1 // pred_fallthru
      _
    // Predicated region
    $region46: #{tpu_custom_call.1} parent=1 // pred_check
      _
    $region47: #{tpu_custom_call.1} parent=1 // pred_check_branch
      %1242 = sbr.rel (0) target = $region49
    $region48: #{tpu_custom_call.1} parent=1 // pred_region
      %1243 = dma.done [#allocation6], 512
    $region49: #{tpu_custom_call.1} parent=1 // pred_fallthru
      _
    %1244 = vsyncpa [#allocation5], 1
    %1245 = vsyncpa [#allocation8], 1
    %1246 = vsyncpa [#allocation6], 1

</llo_original>
